<compile_context>
chip_gen: v7x
topology: tpu7x:2x2x1
jax: 0.10.0
libtpu: 0.0.40
codegen_flags: <defaults>
</compile_context>

<pallas_src>
import functools
import math

import jax
import jax.numpy as jnp
from jax import lax
from jax.experimental import pallas as pl
from jax.experimental.pallas import tpu as pltpu


def _round_up(x, m):
    return (x + m - 1) // m * m


def _softshrink(v, lam):
    return jnp.where(v > lam, v - lam, jnp.where(v < -lam, v + lam, 0.0))


# ---------------------------------------------------------------------------
# DYAN dictionary + Lipschitz constant (tiny per-call prep, plain JAX)
# ---------------------------------------------------------------------------
def create_real_dictionary(T, rr, theta):
    """Dict (T, 4N+1): [1, r^i cos(i th), (-r)^i cos(i th),
                           r^i sin(i th), (-r)^i sin(i th)]."""
    i = jnp.arange(T, dtype=jnp.float32)[:, None]                 # (T, 1)
    r = rr.astype(jnp.float32)[None, :]                           # (1, N)
    th = theta.astype(jnp.float32)[None, :]
    pow_r = r ** i
    alt = jnp.where(jnp.mod(i, 2.0) == 0.0, 1.0, -1.0)            # (-1)^i
    cos_t = jnp.cos(i * th)
    sin_t = jnp.sin(i * th)
    ones = jnp.ones((T, 1), jnp.float32)
    return jnp.concatenate(
        [ones, pow_r * cos_t, alt * pow_r * cos_t,
         pow_r * sin_t, alt * pow_r * sin_t], axis=1)             # (T, 4N+1)


def _spectral_norm_psd(M, iters=64):
    """Largest eigenvalue of a symmetric PSD matrix via power iteration
    (torch.norm(DtD, 2) equivalent)."""
    n = M.shape[0]
    v0 = jnp.full((n,), 1.0 / math.sqrt(n), jnp.float32)

    def body(_, v):
        w = M @ v
        return w / (jnp.linalg.norm(w) + 1e-12)

    v = lax.fori_loop(0, iters, body, v0)
    return jnp.linalg.norm(M @ v)


# ---------------------------------------------------------------------------
# Fused Pallas kernel: full FISTA iteration loop + hard Gumbel-sigmoid
# binarisation for one column tile of (batch * feature) samples.
# ---------------------------------------------------------------------------
def _fista_binarize_kernel(a_ref, dts_ref, lam_ref, y_ref,
                           sc_ref, bc_ref,
                           dty_ref, x_ref, w_ref, *, n_iter):
    f32 = jnp.float32
    lam = lam_ref[0]                                   # lam / L (SMEM scalar)

    # DtY / L for this column tile; VMEM-resident for the whole loop.
    dty_ref[...] = jnp.dot(dts_ref[...], y_ref[...], preferred_element_type=f32)
    x_ref[...] = jnp.zeros_like(x_ref)
    w_ref[...] = jnp.zeros_like(w_ref)

    def body(_, t):
        ay = jnp.dot(a_ref[...], w_ref[...], preferred_element_type=f32)
        x_new = _softshrink(ay + dty_ref[...], lam)
        t_new = 0.5 * (1.0 + jnp.sqrt(1.0 + 4.0 * t * t))
        tt = (t - 1.0) / t_new
        w_ref[...] = (1.0 + tt) * x_new - tt * x_ref[...]
        x_ref[...] = x_new
        return t_new

    # TODO(synk): the PyTorch FISTA also breaks early when
    # ||x_old - x_new||_2 / n < 1e-4; a fixed iteration count is used here.
    lax.fori_loop(0, n_iter, body, f32(1.0))

    x = x_ref[...]
    sc_ref[...] = x
    # GumbelSigmoid(force_hard=True, temperature=0.1, inference=True):
    #   hard = (sigmoid(x / 0.1) > 0.5)  ==  (x > 0)
    bc_ref[...] = (x > 0.0).astype(f32)


# ---------------------------------------------------------------------------
# Forward wrapper (binarizeSparseCode.forward)
# ---------------------------------------------------------------------------
def binarize_sparse_code_forward(rr, theta, x, T, *, fista_lam=0.1,
                                 fista_iters=40, col_tile=128, inference=True):
    """x: (B, T, F) f32.  Returns (binaryCode, sparseCode, Dict) with shapes
    ((B, 4N+1, F), (B, 4N+1, F), (T, 4N+1))."""
    B, Tx, F = x.shape
    assert Tx == T and B * F >= 1
    P = 4 * rr.shape[0] + 1

    # ---- tiny prep: dictionary, Lipschitz constant, iteration matrix -------
    D = create_real_dictionary(T, rr, theta)                      # (T, P)
    DtD = jnp.dot(D.T, D, precision=lax.Precision.HIGHEST)        # (P, P)
    linv = 1.0 / _spectral_norm_psd(DtD)
    A = jnp.eye(P, dtype=jnp.float32) - DtD * linv
    Dts = D.T * linv                                              # (P, T)
    lam_s = jnp.reshape(jnp.float32(fista_lam) * linv, (1,))

    # ---- pad to TPU-friendly shapes (zero padding is a FISTA fixed point) --
    P_pad = _round_up(P, 128)
    T_pad = _round_up(T, 8)
    M = B * F
    m_tile = max(128, min(_round_up(col_tile, 128), _round_up(M, 128)))
    M_pad = _round_up(max(M, m_tile), m_tile)

    A_p = jnp.zeros((P_pad, P_pad), jnp.float32).at[:P, :P].set(A)
    Dts_p = jnp.zeros((P_pad, T_pad), jnp.float32).at[:P, :T].set(Dts)
    Yk = jnp.transpose(x.astype(jnp.float32), (1, 0, 2)).reshape(T, M)
    Yk_p = jnp.zeros((T_pad, M_pad), jnp.float32).at[:T, :M].set(Yk)

    sc_p, bc_p = pl.pallas_call(
        functools.partial(_fista_binarize_kernel, n_iter=fista_iters),
        out_shape=(jax.ShapeDtypeStruct((P_pad, M_pad), jnp.float32),
                   jax.ShapeDtypeStruct((P_pad, M_pad), jnp.float32)),
        grid=(M_pad // m_tile,),
        in_specs=[
            pl.BlockSpec((P_pad, P_pad), lambda i: (0, 0)),       # A (resident)
            pl.BlockSpec((P_pad, T_pad), lambda i: (0, 0)),       # D^T/L (resident)
            pl.BlockSpec(memory_space=pltpu.MemorySpace.SMEM),    # lam/L scalar
            pl.BlockSpec((T_pad, m_tile), lambda i: (0, i)),      # Y column tile
        ],
        out_specs=(pl.BlockSpec((P_pad, m_tile), lambda i: (0, i)),
                   pl.BlockSpec((P_pad, m_tile), lambda i: (0, i))),
        scratch_shapes=[
            pltpu.VMEM((P_pad, m_tile), jnp.float32),   # DtY / L
            pltpu.VMEM((P_pad, m_tile), jnp.float32),   # x_old
            pltpu.VMEM((P_pad, m_tile), jnp.float32),   # y_old (momentum)
        ],
        compiler_params=pltpu.CompilerParams(
            dimension_semantics=("parallel",)),
    )(A_p, Dts_p, lam_s, Yk_p)

    sparse_code = sc_p[:P, :M].reshape(P, B, F).transpose(1, 0, 2)   # (B, P, F)
    binary_code = bc_p[:P, :M].reshape(P, B, F).transpose(1, 0, 2)
    if not inference:
        # TODO(synk): training-time GumbelSigmoid (additive Gumbel noise before
        # the soft sigmoid + straight-through) is not implemented; the kernel
        # produces the module's Inference=True hard-threshold path.
        pass
    return binary_code, sparse_code, D


# ---------------------------------------------------------------------------
# Plain-JAX/XLA reference of the same algorithm (f32, HIGHEST precision)
# ---------------------------------------------------------------------------
def _reference_forward(rr, theta, x, T, fista_lam, fista_iters):
    D = create_real_dictionary(T, rr, theta)
    P = D.shape[1]
    DtD = jnp.dot(D.T, D, precision=lax.Precision.HIGHEST)
    linv = 1.0 / _spectral_norm_psd(DtD)
    A = jnp.eye(P, dtype=jnp.float32) - DtD * linv
    DtY = jnp.einsum('tp,btf->bpf', D, x.astype(jnp.float32),
                     precision=lax.Precision.HIGHEST) * linv
    lam = fista_lam * linv
    B, _, F = x.shape
    x_old = jnp.zeros((B, P, F), jnp.float32)
    y_old = jnp.zeros((B, P, F), jnp.float32)
    t = 1.0
    for _ in range(fista_iters):
        ay = jnp.einsum('pq,bqf->bpf', A, y_old,
                        precision=lax.Precision.HIGHEST) + DtY
        x_new = _softshrink(ay, lam)
        t_new = 0.5 * (1.0 + math.sqrt(1.0 + 4.0 * t * t))
        tt = (t - 1.0) / t_new
        y_old = (1.0 + tt) * x_new - tt * x_old
        x_old, t = x_new, t_new
    sparse_code = x_old
    binary_code = (sparse_code > 0.0).astype(jnp.float32)
    return binary_code, sparse_code, D


# ---------------------------------------------------------------------------
if __name__ == "__main__":
    key = jax.random.PRNGKey(0)
    k_rr, k_th, k_x = jax.random.split(key, 3)

    N = 40                      # pole radii  -> Npole = 4*40 + 1 = 161
    T = 8                       # sequence length
    B, F = 2, 32                # batch, feature columns (e.g. 16 joints x 2D)
    fista_lam = 0.1
    fista_iters = 40

    Drr = jax.random.uniform(k_rr, (N,), jnp.float32, 0.85, 1.15)
    Dtheta = jax.random.uniform(k_th, (N,), jnp.float32, 0.05, math.pi - 0.05)
    x = jax.random.normal(k_x, (B, T, F), jnp.float32)

    fwd = jax.jit(functools.partial(binarize_sparse_code_forward, T=T,
                                    fista_lam=fista_lam,
                                    fista_iters=fista_iters))
    binary_code, sparse_code, dictionary = jax.block_until_ready(
        fwd(Drr, Dtheta, x))

    P = 4 * N + 1
    assert binary_code.shape == (B, P, F), binary_code.shape
    assert sparse_code.shape == (B, P, F), sparse_code.shape
    assert dictionary.shape == (T, P), dictionary.shape
    assert bool(jnp.all(jnp.isfinite(sparse_code)))
    # Hard Gumbel-sigmoid binarisation must be consistent with the sparse code.
    assert bool(jnp.all(binary_code == (sparse_code > 0.0).astype(jnp.float32)))

    # Numerical check against a plain-JAX/XLA reference of the same algorithm.
    bc_ref, sc_ref, d_ref = _reference_forward(Drr, Dtheta, x, T, fista_lam,
                                               fista_iters)
    assert bool(jnp.allclose(dictionary, d_ref, rtol=1e-6, atol=1e-6))
    assert bool(jnp.allclose(sparse_code, sc_ref, rtol=2e-2, atol=5e-3))
    assert float(jnp.mean(jnp.abs(binary_code - bc_ref))) < 0.01

    print("KERNEL_OK")
</pallas_src>

<mosaic_0001>
module attributes {stable_mosaic.version = 11 : i64} {
  func.func @_fista_binarize_kernel(%arg0: i32, %arg1: memref<256x256xf32, #tpu.memory_space<vmem>>, %arg2: memref<256x8xf32, #tpu.memory_space<vmem>>, %arg3: memref<1xf32, #tpu.memory_space<smem>>, %arg4: memref<8x128xf32, #tpu.memory_space<vmem>>, %arg5: memref<256x128xf32, #tpu.memory_space<vmem>>, %arg6: memref<256x128xf32, #tpu.memory_space<vmem>>, %arg7: memref<256x128xf32, #tpu.memory_space<vmem>>, %arg8: memref<256x128xf32, #tpu.memory_space<vmem>>, %arg9: memref<256x128xf32, #tpu.memory_space<vmem>>) attributes {dimension_semantics = [#tpu.dimension_semantics<parallel>], iteration_bounds = array<i64: 1>, scalar_prefetch = 0 : i64, scratch_operands = 3 : i64, tpu.core_type = #tpu.core_type<tc>, window_params = [{pipeline_mode = #tpu.pipeline_mode<synchronous>, transform_indices = @transform_0, window_bounds = array<i64: 256, 256>}, {pipeline_mode = #tpu.pipeline_mode<synchronous>, transform_indices = @transform_1, window_bounds = array<i64: 256, 8>}, {transform_indices = @transform_2, window_bounds = array<i64: 1>}, {transform_indices = @transform_3, window_bounds = array<i64: 8, 128>}, {transform_indices = @transform_4, window_bounds = array<i64: 256, 128>}, {transform_indices = @transform_5, window_bounds = array<i64: 256, 128>}]} {
    %c0 = arith.constant 0 : index
    %0 = memref.load %arg3[%c0] : memref<1xf32, #tpu.memory_space<smem>>
    %c0_0 = arith.constant 0 : index
    %c0_1 = arith.constant 0 : index
    %1 = vector.load %arg2[%c0_0, %c0_1] : memref<256x8xf32, #tpu.memory_space<vmem>>, vector<256x8xf32>
    %c0_2 = arith.constant 0 : index
    %c0_3 = arith.constant 0 : index
    %2 = vector.load %arg4[%c0_2, %c0_3] : memref<8x128xf32, #tpu.memory_space<vmem>>, vector<8x128xf32>
    %cst = arith.constant dense<0.000000e+00> : vector<256x128xf32>
    %3 = tpu.matmul %1, %2, %cst {dimension_numbers = #tpu.dot_dimension_numbers<[1], [0], [0], [1], [0, 0, 1, 1], [], []>} : vector<256x8xf32>, vector<8x128xf32>, vector<256x128xf32> -> vector<256x128xf32>
    %c0_4 = arith.constant 0 : index
    %c0_5 = arith.constant 0 : index
    %4 = vector.load %arg7[%c0_4, %c0_5] : memref<256x128xf32, #tpu.memory_space<vmem>>, vector<256x128xf32>
    tpu.vector_store %arg7[%c0_4, %c0_5], %3 {strides = array<i32>} : memref<256x128xf32, #tpu.memory_space<vmem>>, vector<256x128xf32>,
    %cst_6 = arith.constant 0.000000e+00 : f32
    %5 = vector.broadcast %cst_6 : f32 to vector<256x128xf32>
    %c0_7 = arith.constant 0 : index
    %c0_8 = arith.constant 0 : index
    %6 = vector.load %arg8[%c0_7, %c0_8] : memref<256x128xf32, #tpu.memory_space<vmem>>, vector<256x128xf32>
    tpu.vector_store %arg8[%c0_7, %c0_8], %5 {strides = array<i32>} : memref<256x128xf32, #tpu.memory_space<vmem>>, vector<256x128xf32>,
    %cst_9 = arith.constant 0.000000e+00 : f32
    %7 = vector.broadcast %cst_9 : f32 to vector<256x128xf32>
    %c0_10 = arith.constant 0 : index
    %c0_11 = arith.constant 0 : index
    %8 = vector.load %arg9[%c0_10, %c0_11] : memref<256x128xf32, #tpu.memory_space<vmem>>, vector<256x128xf32>
    tpu.vector_store %arg9[%c0_10, %c0_11], %7 {strides = array<i32>} : memref<256x128xf32, #tpu.memory_space<vmem>>, vector<256x128xf32>,
    %cst_12 = arith.constant 1.000000e+00 : f32
    %c0_i32 = arith.constant 0 : i32
    %c40_i32 = arith.constant 40 : i32
    %9 = arith.addi %c0_i32, %c40_i32 : i32
    %c1_i32 = arith.constant 1 : i32
    %10 = scf.for %arg10 = %c0_i32 to %9 step %c1_i32 iter_args(%arg11 = %cst_12) -> (f32)  : i32 {
      %c0_20 = arith.constant 0 : index
      %c0_21 = arith.constant 0 : index
      %18 = vector.load %arg1[%c0_20, %c0_21] : memref<256x256xf32, #tpu.memory_space<vmem>>, vector<256x256xf32>
      %c0_22 = arith.constant 0 : index
      %c0_23 = arith.constant 0 : index
      %19 = vector.load %arg9[%c0_22, %c0_23] : memref<256x128xf32, #tpu.memory_space<vmem>>, vector<256x128xf32>
      %cst_24 = arith.constant dense<0.000000e+00> : vector<256x128xf32>
      %20 = tpu.matmul %18, %19, %cst_24 {dimension_numbers = #tpu.dot_dimension_numbers<[1], [0], [0], [1], [0, 0, 1, 1], [], []>} : vector<256x256xf32>, vector<256x128xf32>, vector<256x128xf32> -> vector<256x128xf32>
      %c0_25 = arith.constant 0 : index
      %c0_26 = arith.constant 0 : index
      %21 = vector.load %arg7[%c0_25, %c0_26] : memref<256x128xf32, #tpu.memory_space<vmem>>, vector<256x128xf32>
      %22 = arith.addf %20, %21 : vector<256x128xf32>
      %23 = vector.broadcast %0 : f32 to vector<256x128xf32>
      %24 = arith.cmpf ogt, %22, %23 : vector<256x128xf32>
      %25 = vector.broadcast %0 : f32 to vector<256x128xf32>
      %26 = arith.subf %22, %25 : vector<256x128xf32>
      %cst_27 = arith.constant 0.000000e+00 : f32
      %27 = arith.subf %cst_27, %0 : f32
      %28 = vector.broadcast %27 : f32 to vector<256x128xf32>
      %29 = arith.cmpf olt, %22, %28 : vector<256x128xf32>
      %30 = vector.broadcast %0 : f32 to vector<256x128xf32>
      %31 = arith.addf %22, %30 : vector<256x128xf32>
      %cst_28 = arith.constant 0.000000e+00 : f32
      %32 = vector.broadcast %cst_28 : f32 to vector<256x128xf32>
      %33 = arith.select %29, %31, %32 : vector<256x128xi1>, vector<256x128xf32>
      %34 = arith.select %24, %26, %33 : vector<256x128xi1>, vector<256x128xf32>
      %cst_29 = arith.constant 4.000000e+00 : f32
      %35 = arith.mulf %cst_29, %arg11 : f32
      %36 = arith.mulf %35, %arg11 : f32
      %cst_30 = arith.constant 1.000000e+00 : f32
      %37 = arith.addf %cst_30, %36 : f32
      %38 = math.sqrt %37 : f32
      %cst_31 = arith.constant 1.000000e+00 : f32
      %39 = arith.addf %cst_31, %38 : f32
      %cst_32 = arith.constant 5.000000e-01 : f32
      %40 = arith.mulf %cst_32, %39 : f32
      %cst_33 = arith.constant 1.000000e+00 : f32
      %41 = arith.subf %arg11, %cst_33 : f32
      %42 = arith.divf %41, %40 : f32
      %cst_34 = arith.constant 1.000000e+00 : f32
      %43 = arith.addf %cst_34, %42 : f32
      %44 = vector.broadcast %43 : f32 to vector<256x128xf32>
      %45 = arith.mulf %44, %34 : vector<256x128xf32>
      %c0_35 = arith.constant 0 : index
      %c0_36 = arith.constant 0 : index
      %46 = vector.load %arg8[%c0_35, %c0_36] : memref<256x128xf32, #tpu.memory_space<vmem>>, vector<256x128xf32>
      %47 = vector.broadcast %42 : f32 to vector<256x128xf32>
      %48 = arith.mulf %47, %46 : vector<256x128xf32>
      %49 = arith.subf %45, %48 : vector<256x128xf32>
      %c0_37 = arith.constant 0 : index
      %c0_38 = arith.constant 0 : index
      %50 = vector.load %arg9[%c0_37, %c0_38] : memref<256x128xf32, #tpu.memory_space<vmem>>, vector<256x128xf32>
      tpu.vector_store %arg9[%c0_37, %c0_38], %49 {strides = array<i32>} : memref<256x128xf32, #tpu.memory_space<vmem>>, vector<256x128xf32>,
      %c0_39 = arith.constant 0 : index
      %c0_40 = arith.constant 0 : index
      %51 = vector.load %arg8[%c0_39, %c0_40] : memref<256x128xf32, #tpu.memory_space<vmem>>, vector<256x128xf32>
      tpu.vector_store %arg8[%c0_39, %c0_40], %34 {strides = array<i32>} : memref<256x128xf32, #tpu.memory_space<vmem>>, vector<256x128xf32>,
      scf.yield %40 : f32
    }
    %c0_13 = arith.constant 0 : index
    %c0_14 = arith.constant 0 : index
    %11 = vector.load %arg8[%c0_13, %c0_14] : memref<256x128xf32, #tpu.memory_space<vmem>>, vector<256x128xf32>
    %c0_15 = arith.constant 0 : index
    %c0_16 = arith.constant 0 : index
    %12 = vector.load %arg5[%c0_15, %c0_16] : memref<256x128xf32, #tpu.memory_space<vmem>>, vector<256x128xf32>
    tpu.vector_store %arg5[%c0_15, %c0_16], %11 {strides = array<i32>} : memref<256x128xf32, #tpu.memory_space<vmem>>, vector<256x128xf32>,
    %cst_17 = arith.constant 0.000000e+00 : f32
    %13 = vector.broadcast %cst_17 : f32 to vector<256x128xf32>
    %14 = arith.cmpf ogt, %11, %13 : vector<256x128xf32>
    %15 = arith.extui %14 : vector<256x128xi1> to vector<256x128xi32>
    %16 = arith.sitofp %15 : vector<256x128xi32> to vector<256x128xf32>
    %c0_18 = arith.constant 0 : index
    %c0_19 = arith.constant 0 : index
    %17 = vector.load %arg6[%c0_18, %c0_19] : memref<256x128xf32, #tpu.memory_space<vmem>>, vector<256x128xf32>
    tpu.vector_store %arg6[%c0_18, %c0_19], %16 {strides = array<i32>} : memref<256x128xf32, #tpu.memory_space<vmem>>, vector<256x128xf32>,
    return
  }
  func.func @transform_0(%arg0: i32) -> (i32, i32) {
    %c0_i32 = arith.constant 0 : i32
    %c0_i32_0 = arith.constant 0 : i32
    %c0_i32_1 = arith.constant 0 : i32
    return %c0_i32, %c0_i32_0 : i32, i32
  }
  func.func @transform_1(%arg0: i32) -> (i32, i32) {
    %c0_i32 = arith.constant 0 : i32
    %c0_i32_0 = arith.constant 0 : i32
    %c0_i32_1 = arith.constant 0 : i32
    return %c0_i32, %c0_i32_0 : i32, i32
  }
  func.func @transform_2(%arg0: i32) -> i32 {
    %c0_i32 = arith.constant 0 : i32
    %c0_i32_0 = arith.constant 0 : i32
    return %c0_i32 : i32
  }
  func.func @transform_3(%arg0: i32) -> (i32, i32) {
    %c0_i32 = arith.constant 0 : i32
    %c0_i32_0 = arith.constant 0 : i32
    return %c0_i32, %arg0 : i32, i32
  }
  func.func @transform_4(%arg0: i32) -> (i32, i32) {
    %c0_i32 = arith.constant 0 : i32
    %c0_i32_0 = arith.constant 0 : i32
    return %c0_i32, %arg0 : i32, i32
  }
  func.func @transform_5(%arg0: i32) -> (i32, i32) {
    %c0_i32 = arith.constant 0 : i32
    %c0_i32_0 = arith.constant 0 : i32
    return %c0_i32, %arg0 : i32, i32
  }
}

</mosaic_0001>

<llo_original>
// kernel: custom-call
$region0: #{custom-call}
  %s0 = inlined_call_operand.vmem [shape: f32[161], index: 0, kind: output, shape index: {}]

// kernel: binarize_sparse_code_forward.1
$region0: #{binarize_sparse_code_forward.1}
  #allocation0 [shape = 'u32[]', space=smem, size = 0x4, offset = 0x4, fixed_abs, tag = 'smem constant byte address 0x4 - core index']
  #allocation1 [shape = 'u32[144,128]{1,0:T(1,128)}', space=vmem, size = 0x12000, scoped, tag = 'internal scratch']
  #allocation2 [shape = 'f32[256,128]{1,0:T(8,128)}', space=vmem, size = 0x20000, scoped, tag = 'scratch operand']
  #allocation3 [shape = 'f32[256,128]{1,0:T(8,128)}', space=vmem, size = 0x20000, scoped, tag = 'scratch operand']
  #allocation4 [shape = 'f32[256,128]{1,0:T(8,128)}', space=vmem, size = 0x20000, scoped, tag = 'scratch operand']
  #allocation5 [shape = 'f32[1]{0:T(128)S(6)}', space=smem, size = 0x200, scoped, tag = 'scoped memory for binarize_sparse_code_forward.1']
  %s0 = inlined_call_operand.vmem [shape: f32[256,256], index: 0, kind: input, shape index: {}]
  %s1 = inlined_call_operand.vmem [shape: f32[256,8], index: 1, kind: input, shape index: {}]
  %s2 = inlined_call_operand.<no memory space> [shape: f32[1], index: 2, kind: input, shape index: {}]
  %s3 = inlined_call_operand.vmem [shape: f32[8,128], index: 3, kind: input, shape index: {}]
  %s4 = inlined_call_operand.vmem [shape: f32[256,128], index: 4, kind: output, shape index: {0}]
  %s5 = inlined_call_operand.vmem [shape: f32[256,128], index: 5, kind: output, shape index: {1}]
  %6 = xla_tuple %s4, %s5
  %s7 = sld [smem:[#allocation0]]
  $region41: #{binarize_sparse_code_forward.1} parent=0
    _
  %s9 = ssub.s32 1, %s7
  %s10 = scalar_select 0, %s9, %s7
  %11 = sst [smem:[#allocation5]] %s2
  // Predicated region
  $region2: #{binarize_sparse_code_forward.1} parent=0 // pred_check
    _
  $region3: #{binarize_sparse_code_forward.1} parent=0 // pred_check_branch
    %13 = sbr.rel (0) target = $region5
  $region4: #{binarize_sparse_code_forward.1} parent=0 // pred_region
    _
  $region5: #{binarize_sparse_code_forward.1} parent=0 // pred_fallthru
    _
  // Predicated region
  $region6: #{binarize_sparse_code_forward.1} parent=0 // pred_check
    _
  $region7: #{binarize_sparse_code_forward.1} parent=0 // pred_check_branch
    %15 = sbr.rel (0) target = $region9
  $region8: #{binarize_sparse_code_forward.1} parent=0 // pred_region
    _
  $region9: #{binarize_sparse_code_forward.1} parent=0 // pred_fallthru
    _
  // Predicated region
  $region10: #{binarize_sparse_code_forward.1} parent=0 // pred_check
    _
  $region11: #{binarize_sparse_code_forward.1} parent=0 // pred_check_branch
    %17 = sbr.rel (0) target = $region13
  $region12: #{binarize_sparse_code_forward.1} parent=0 // pred_region
    _
  $region13: #{binarize_sparse_code_forward.1} parent=0 // pred_fallthru
    _
  // Predicated region
  $region14: #{binarize_sparse_code_forward.1} parent=0 // pred_check
    _
  $region15: #{binarize_sparse_code_forward.1} parent=0 // pred_check_branch
    %19 = sbr.rel (0) target = $region17
  $region16: #{binarize_sparse_code_forward.1} parent=0 // pred_region
    _
  $region17: #{binarize_sparse_code_forward.1} parent=0 // pred_fallthru
    _
  %s20 = sld [smem:[#allocation5]]
  %v21 = vld [vmem:[%s1] sm:$0xff]
  %v22 = vld [vmem:[%s1 + $0x8] sm:$0xff]
  %v23 = vld [vmem:[%s1 + $0x10] sm:$0xff]
  %v24 = vld [vmem:[%s1 + $0x18] sm:$0xff]
  %v25 = vld [vmem:[%s1 + $0x20] sm:$0xff]
  %v26 = vld [vmem:[%s1 + $0x28] sm:$0xff]
  %v27 = vld [vmem:[%s1 + $0x30] sm:$0xff]
  %v28 = vld [vmem:[%s1 + $0x38] sm:$0xff]
  %v29 = vld [vmem:[%s1 + $0x40] sm:$0xff]
  %v30 = vld [vmem:[%s1 + $0x48] sm:$0xff]
  %v31 = vld [vmem:[%s1 + $0x50] sm:$0xff]
  %v32 = vld [vmem:[%s1 + $0x58] sm:$0xff]
  %v33 = vld [vmem:[%s1 + $0x60] sm:$0xff]
  %v34 = vld [vmem:[%s1 + $0x68] sm:$0xff]
  %v35 = vld [vmem:[%s1 + $0x70] sm:$0xff]
  %v36 = vld [vmem:[%s1 + $0x78] sm:$0xff]
  %v37 = vld [vmem:[%s1 + $0x80] sm:$0xff]
  %v38 = vld [vmem:[%s1 + $0x88] sm:$0xff]
  %v39 = vld [vmem:[%s1 + $0x90] sm:$0xff]
  %v40 = vld [vmem:[%s1 + $0x98] sm:$0xff]
  %v41 = vld [vmem:[%s1 + $0xa0] sm:$0xff]
  %v42 = vld [vmem:[%s1 + $0xa8] sm:$0xff]
  %v43 = vld [vmem:[%s1 + $0xb0] sm:$0xff]
  %v44 = vld [vmem:[%s1 + $0xb8] sm:$0xff]
  %v45 = vld [vmem:[%s1 + $0xc0] sm:$0xff]
  %v46 = vld [vmem:[%s1 + $0xc8] sm:$0xff]
  %v47 = vld [vmem:[%s1 + $0xd0] sm:$0xff]
  %v48 = vld [vmem:[%s1 + $0xd8] sm:$0xff]
  %v49 = vld [vmem:[%s1 + $0xe0] sm:$0xff]
  %v50 = vld [vmem:[%s1 + $0xe8] sm:$0xff]
  %v51 = vld [vmem:[%s1 + $0xf0] sm:$0xff]
  %v52 = vld [vmem:[%s1 + $0xf8] sm:$0xff]
  %v53 = vld [vmem:[%s3] sm:$0xff]
  %vm54 = vcmask 64512
  %v56 = vsel %vm54, %v21, 0
  %v59 = vsel %vm54, %v22, 0
  %v62 = vsel %vm54, %v23, 0
  %v65 = vsel %vm54, %v24, 0
  %v68 = vsel %vm54, %v25, 0
  %v71 = vsel %vm54, %v26, 0
  %v74 = vsel %vm54, %v27, 0
  %v77 = vsel %vm54, %v28, 0
  %v80 = vsel %vm54, %v29, 0
  %v83 = vsel %vm54, %v30, 0
  %v86 = vsel %vm54, %v31, 0
  %v89 = vsel %vm54, %v32, 0
  %v92 = vsel %vm54, %v33, 0
  %v95 = vsel %vm54, %v34, 0
  %v98 = vsel %vm54, %v35, 0
  %v101 = vsel %vm54, %v36, 0
  %v104 = vsel %vm54, %v37, 0
  %v107 = vsel %vm54, %v38, 0
  %v110 = vsel %vm54, %v39, 0
  %v113 = vsel %vm54, %v40, 0
  %v116 = vsel %vm54, %v41, 0
  %v119 = vsel %vm54, %v42, 0
  %v122 = vsel %vm54, %v43, 0
  %v125 = vsel %vm54, %v44, 0
  %v128 = vsel %vm54, %v45, 0
  %v131 = vsel %vm54, %v46, 0
  %v134 = vsel %vm54, %v47, 0
  %v137 = vsel %vm54, %v48, 0
  %v140 = vsel %vm54, %v49, 0
  %v143 = vsel %vm54, %v50, 0
  %v146 = vsel %vm54, %v51, 0
  %v149 = vsel %vm54, %v52, 0
  %151 = vmatprep.subr.mxu0 0.0
  %152 = vmatpush1.msra.mxu0 %v53
  %153 = vmatprep.subr.mxu0 0.0
  %154 = vmatpush1.msra.mxu0 0.0
  %155 = vmatprep.subr.mxu0 0.0
  %156 = vmatpush1.msra.mxu0 0.0
  %157 = vmatprep.subr.mxu0 0.0
  %158 = vmatpush1.msra.mxu0 0.0
  %159 = vmatprep.subr.mxu0 0.0
  %160 = vmatpush1.msra.mxu0 0.0
  %161 = vmatprep.subr.mxu0 0.0
  %162 = vmatpush1.msra.mxu0 0.0
  %163 = vmatprep.subr.mxu0 0.0
  %164 = vmatpush1.msra.mxu0 0.0
  %165 = vmatprep.subr.mxu0 0.0
  %166 = vmatpush1.msra.mxu0 0.0
  %167 = vmatprep.subr.mxu0 0.0
  %168 = vmatpush1.msra.mxu0 0.0
  %169 = vmatprep.subr.mxu0 0.0
  %170 = vmatpush1.msra.mxu0 0.0
  %171 = vmatprep.subr.mxu0 0.0
  %172 = vmatpush1.msra.mxu0 0.0
  %173 = vmatprep.subr.mxu0 0.0
  %174 = vmatpush1.msra.mxu0 0.0
  %175 = vmatprep.subr.mxu0 0.0
  %176 = vmatpush1.msra.mxu0 0.0
  %177 = vmatprep.subr.mxu0 0.0
  %178 = vmatpush1.msra.mxu0 0.0
  %179 = vmatprep.subr.mxu0 0.0
  %180 = vmatpush1.msra.mxu0 0.0
  %181 = vmatprep.subr.mxu0 0.0
  %182 = vmatpush1.msra.mxu0 0.0
  %183 = vmatprep.subr.mxu0 0.0
  %184 = vmatpush1.msra.mxu0 0.0
  %185 = vmatprep.subr.mxu0 0.0
  %186 = vmatpush1.msra.mxu0 0.0
  %187 = vmatprep.subr.mxu0 0.0
  %188 = vmatpush1.msra.mxu0 0.0
  %189 = vmatprep.subr.mxu0 0.0
  %190 = vmatpush1.msra.mxu0 0.0
  %191 = vmatprep.subr.mxu0 0.0
  %192 = vmatpush1.msra.mxu0 0.0
  %193 = vmatprep.subr.mxu0 0.0
  %194 = vmatpush1.msra.mxu0 0.0
  %195 = vmatprep.subr.mxu0 0.0
  %196 = vmatpush1.msra.mxu0 0.0
  %197 = vmatprep.subr.mxu0 0.0
  %198 = vmatpush1.msra.mxu0 0.0
  %199 = vmatprep.subr.mxu0 0.0
  %200 = vmatpush1.msra.mxu0 0.0
  %201 = vmatprep.subr.mxu0 0.0
  %202 = vmatpush1.msra.mxu0 0.0
  %203 = vmatprep.subr.mxu0 0.0
  %204 = vmatpush1.msra.mxu0 0.0
  %205 = vmatprep.subr.mxu0 0.0
  %206 = vmatpush1.msra.mxu0 0.0
  %207 = vmatprep.subr.mxu0 0.0
  %208 = vmatpush1.msra.mxu0 0.0
  %209 = vmatprep.subr.mxu0 0.0
  %210 = vmatpush1.msra.mxu0 0.0
  %211 = vmatprep.subr.mxu0 0.0
  %212 = vmatpush1.msra.mxu0 0.0
  %213 = vmatprep.subr.mxu0 0.0
  %214 = vmatpush1.msra.mxu0 0.0
  %215 = vmatprep.mubr.f32.mxu0 0.0
  %216 = vmatmul.mubr.f32.gmra.mrb[0].mxu0 %v56
  %v217 = vpop.f32.mrb[0].mxu0
  %v218 = vadd.f32 0.0, %v217
  %v219 = vpop.f32.mrb[0].mxu0
  %220 = vmatprep.mubr.f32.mxu0 0.0
  %221 = vmatmul.mubr.f32.gmra.mrb[0].mxu0 %v59
  %v222 = vpop.f32.mrb[0].mxu0
  %v223 = vadd.f32 0.0, %v222
  %v224 = vpop.f32.mrb[0].mxu0
  %225 = vmatprep.mubr.f32.mxu0 0.0
  %226 = vmatmul.mubr.f32.gmra.mrb[0].mxu0 %v62
  %v227 = vpop.f32.mrb[0].mxu0
  %v228 = vadd.f32 0.0, %v227
  %v229 = vpop.f32.mrb[0].mxu0
  %230 = vmatprep.mubr.f32.mxu0 0.0
  %231 = vmatmul.mubr.f32.gmra.mrb[0].mxu0 %v65
  %v232 = vpop.f32.mrb[0].mxu0
  %v233 = vadd.f32 0.0, %v232
  %v234 = vpop.f32.mrb[0].mxu0
  %235 = vmatprep.mubr.f32.mxu0 0.0
  %236 = vmatmul.mubr.f32.gmra.mrb[0].mxu0 %v68
  %v237 = vpop.f32.mrb[0].mxu0
  %v238 = vadd.f32 0.0, %v237
  %v239 = vpop.f32.mrb[0].mxu0
  %240 = vmatprep.mubr.f32.mxu0 0.0
  %241 = vmatmul.mubr.f32.gmra.mrb[0].mxu0 %v71
  %v242 = vpop.f32.mrb[0].mxu0
  %v243 = vadd.f32 0.0, %v242
  %v244 = vpop.f32.mrb[0].mxu0
  %245 = vmatprep.mubr.f32.mxu0 0.0
  %246 = vmatmul.mubr.f32.gmra.mrb[0].mxu0 %v74
  %v247 = vpop.f32.mrb[0].mxu0
  %v248 = vadd.f32 0.0, %v247
  %v249 = vpop.f32.mrb[0].mxu0
  %250 = vmatprep.mubr.f32.mxu0 0.0
  %251 = vmatmul.mubr.f32.gmra.mrb[0].mxu0 %v77
  %v252 = vpop.f32.mrb[0].mxu0
  %v253 = vadd.f32 0.0, %v252
  %v254 = vpop.f32.mrb[0].mxu0
  %255 = vmatprep.mubr.f32.mxu0 0.0
  %256 = vmatmul.mubr.f32.gmra.mrb[0].mxu0 %v80
  %v257 = vpop.f32.mrb[0].mxu0
  %v258 = vadd.f32 0.0, %v257
  %v259 = vpop.f32.mrb[0].mxu0
  %260 = vmatprep.mubr.f32.mxu0 0.0
  %261 = vmatmul.mubr.f32.gmra.mrb[0].mxu0 %v83
  %v262 = vpop.f32.mrb[0].mxu0
  %v263 = vadd.f32 0.0, %v262
  %v264 = vpop.f32.mrb[0].mxu0
  %265 = vmatprep.mubr.f32.mxu0 0.0
  %266 = vmatmul.mubr.f32.gmra.mrb[0].mxu0 %v86
  %v267 = vpop.f32.mrb[0].mxu0
  %v268 = vadd.f32 0.0, %v267
  %v269 = vpop.f32.mrb[0].mxu0
  %270 = vmatprep.mubr.f32.mxu0 0.0
  %271 = vmatmul.mubr.f32.gmra.mrb[0].mxu0 %v89
  %v272 = vpop.f32.mrb[0].mxu0
  %v273 = vadd.f32 0.0, %v272
  %v274 = vpop.f32.mrb[0].mxu0
  %275 = vmatprep.mubr.f32.mxu0 0.0
  %276 = vmatmul.mubr.f32.gmra.mrb[0].mxu0 %v92
  %v277 = vpop.f32.mrb[0].mxu0
  %v278 = vadd.f32 0.0, %v277
  %v279 = vpop.f32.mrb[0].mxu0
  %280 = vmatprep.mubr.f32.mxu0 0.0
  %281 = vmatmul.mubr.f32.gmra.mrb[0].mxu0 %v95
  %v282 = vpop.f32.mrb[0].mxu0
  %v283 = vadd.f32 0.0, %v282
  %v284 = vpop.f32.mrb[0].mxu0
  %285 = vmatprep.mubr.f32.mxu0 0.0
  %286 = vmatmul.mubr.f32.gmra.mrb[0].mxu0 %v98
  %v287 = vpop.f32.mrb[0].mxu0
  %v288 = vadd.f32 0.0, %v287
  %v289 = vpop.f32.mrb[0].mxu0
  %290 = vmatprep.mubr.f32.mxu0 0.0
  %291 = vmatmul.mubr.f32.gmra.mrb[0].mxu0 %v101
  %v292 = vpop.f32.mrb[0].mxu0
  %v293 = vadd.f32 0.0, %v292
  %v294 = vpop.f32.mrb[0].mxu0
  %295 = vmatprep.mubr.f32.mxu0 0.0
  %296 = vmatmul.mubr.f32.gmra.mrb[0].mxu0 %v104
  %v297 = vpop.f32.mrb[0].mxu0
  %v298 = vadd.f32 0.0, %v297
  %v299 = vpop.f32.mrb[0].mxu0
  %300 = vmatprep.mubr.f32.mxu0 0.0
  %301 = vmatmul.mubr.f32.gmra.mrb[0].mxu0 %v107
  %v302 = vpop.f32.mrb[0].mxu0
  %v303 = vadd.f32 0.0, %v302
  %v304 = vpop.f32.mrb[0].mxu0
  %305 = vmatprep.mubr.f32.mxu0 0.0
  %306 = vmatmul.mubr.f32.gmra.mrb[0].mxu0 %v110
  %v307 = vpop.f32.mrb[0].mxu0
  %v308 = vadd.f32 0.0, %v307
  %v309 = vpop.f32.mrb[0].mxu0
  %310 = vmatprep.mubr.f32.mxu0 0.0
  %311 = vmatmul.mubr.f32.gmra.mrb[0].mxu0 %v113
  %v312 = vpop.f32.mrb[0].mxu0
  %v313 = vadd.f32 0.0, %v312
  %v314 = vpop.f32.mrb[0].mxu0
  %315 = vmatprep.mubr.f32.mxu0 0.0
  %316 = vmatmul.mubr.f32.gmra.mrb[0].mxu0 %v116
  %v317 = vpop.f32.mrb[0].mxu0
  %v318 = vadd.f32 0.0, %v317
  %v319 = vpop.f32.mrb[0].mxu0
  %320 = vmatprep.mubr.f32.mxu0 0.0
  %321 = vmatmul.mubr.f32.gmra.mrb[0].mxu0 %v119
  %v322 = vpop.f32.mrb[0].mxu0
  %v323 = vadd.f32 0.0, %v322
  %v324 = vpop.f32.mrb[0].mxu0
  %325 = vmatprep.mubr.f32.mxu0 0.0
  %326 = vmatmul.mubr.f32.gmra.mrb[0].mxu0 %v122
  %v327 = vpop.f32.mrb[0].mxu0
  %v328 = vadd.f32 0.0, %v327
  %v329 = vpop.f32.mrb[0].mxu0
  %330 = vmatprep.mubr.f32.mxu0 0.0
  %331 = vmatmul.mubr.f32.gmra.mrb[0].mxu0 %v125
  %v332 = vpop.f32.mrb[0].mxu0
  %v333 = vadd.f32 0.0, %v332
  %v334 = vpop.f32.mrb[0].mxu0
  %335 = vmatprep.mubr.f32.mxu0 0.0
  %336 = vmatmul.mubr.f32.gmra.mrb[0].mxu0 %v128
  %v337 = vpop.f32.mrb[0].mxu0
  %v338 = vadd.f32 0.0, %v337
  %v339 = vpop.f32.mrb[0].mxu0
  %340 = vmatprep.mubr.f32.mxu0 0.0
  %341 = vmatmul.mubr.f32.gmra.mrb[0].mxu0 %v131
  %v342 = vpop.f32.mrb[0].mxu0
  %v343 = vadd.f32 0.0, %v342
  %v344 = vpop.f32.mrb[0].mxu0
  %345 = vmatprep.mubr.f32.mxu0 0.0
  %346 = vmatmul.mubr.f32.gmra.mrb[0].mxu0 %v134
  %v347 = vpop.f32.mrb[0].mxu0
  %v348 = vadd.f32 0.0, %v347
  %v349 = vpop.f32.mrb[0].mxu0
  %350 = vmatprep.mubr.f32.mxu0 0.0
  %351 = vmatmul.mubr.f32.gmra.mrb[0].mxu0 %v137
  %v352 = vpop.f32.mrb[0].mxu0
  %v353 = vadd.f32 0.0, %v352
  %v354 = vpop.f32.mrb[0].mxu0
  %355 = vmatprep.mubr.f32.mxu0 0.0
  %356 = vmatmul.mubr.f32.gmra.mrb[0].mxu0 %v140
  %v357 = vpop.f32.mrb[0].mxu0
  %v358 = vadd.f32 0.0, %v357
  %v359 = vpop.f32.mrb[0].mxu0
  %360 = vmatprep.mubr.f32.mxu0 0.0
  %361 = vmatmul.mubr.f32.gmra.mrb[0].mxu0 %v143
  %v362 = vpop.f32.mrb[0].mxu0
  %v363 = vadd.f32 0.0, %v362
  %v364 = vpop.f32.mrb[0].mxu0
  %365 = vmatprep.mubr.f32.mxu0 0.0
  %366 = vmatmul.mubr.f32.gmra.mrb[0].mxu0 %v146
  %v367 = vpop.f32.mrb[0].mxu0
  %v368 = vadd.f32 0.0, %v367
  %v369 = vpop.f32.mrb[0].mxu0
  %370 = vmatprep.mubr.f32.mxu0 0.0
  %371 = vmatmul.mubr.f32.gmra.mrb[0].mxu0 %v149
  %v372 = vpop.f32.mrb[0].mxu0
  %v373 = vadd.f32 0.0, %v372
  %v374 = vpop.f32.mrb[0].mxu0
  %375 = vdwg.mxu0
  %376 = vst [vmem:[#allocation2] sm:$0xff] %v218
  %377 = vst [vmem:[#allocation2 + $0x8] sm:$0xff] %v223
  %378 = vst [vmem:[#allocation2 + $0x10] sm:$0xff] %v228
  %379 = vst [vmem:[#allocation2 + $0x18] sm:$0xff] %v233
  %380 = vst [vmem:[#allocation2 + $0x20] sm:$0xff] %v238
  %381 = vst [vmem:[#allocation2 + $0x28] sm:$0xff] %v243
  %382 = vst [vmem:[#allocation2 + $0x30] sm:$0xff] %v248
  %383 = vst [vmem:[#allocation2 + $0x38] sm:$0xff] %v253
  %384 = vst [vmem:[#allocation2 + $0x40] sm:$0xff] %v258
  %385 = vst [vmem:[#allocation2 + $0x48] sm:$0xff] %v263
  %386 = vst [vmem:[#allocation2 + $0x50] sm:$0xff] %v268
  %387 = vst [vmem:[#allocation2 + $0x58] sm:$0xff] %v273
  %388 = vst [vmem:[#allocation2 + $0x60] sm:$0xff] %v278
  %389 = vst [vmem:[#allocation2 + $0x68] sm:$0xff] %v283
  %390 = vst [vmem:[#allocation2 + $0x70] sm:$0xff] %v288
  %391 = vst [vmem:[#allocation2 + $0x78] sm:$0xff] %v293
  %392 = vst [vmem:[#allocation2 + $0x80] sm:$0xff] %v298
  %393 = vst [vmem:[#allocation2 + $0x88] sm:$0xff] %v303
  %394 = vst [vmem:[#allocation2 + $0x90] sm:$0xff] %v308
  %395 = vst [vmem:[#allocation2 + $0x98] sm:$0xff] %v313
  %396 = vst [vmem:[#allocation2 + $0xa0] sm:$0xff] %v318
  %397 = vst [vmem:[#allocation2 + $0xa8] sm:$0xff] %v323
  %398 = vst [vmem:[#allocation2 + $0xb0] sm:$0xff] %v328
  %399 = vst [vmem:[#allocation2 + $0xb8] sm:$0xff] %v333
  %400 = vst [vmem:[#allocation2 + $0xc0] sm:$0xff] %v338
  %401 = vst [vmem:[#allocation2 + $0xc8] sm:$0xff] %v343
  %402 = vst [vmem:[#allocation2 + $0xd0] sm:$0xff] %v348
  %403 = vst [vmem:[#allocation2 + $0xd8] sm:$0xff] %v353
  %404 = vst [vmem:[#allocation2 + $0xe0] sm:$0xff] %v358
  %405 = vst [vmem:[#allocation2 + $0xe8] sm:$0xff] %v363
  %406 = vst [vmem:[#allocation2 + $0xf0] sm:$0xff] %v368
  %407 = vst [vmem:[#allocation2 + $0xf8] sm:$0xff] %v373
  %408 = vst [vmem:[#allocation3] sm:$0xff] 0.0
  %409 = vst [vmem:[#allocation3 + $0x8] sm:$0xff] 0.0
  %410 = vst [vmem:[#allocation3 + $0x10] sm:$0xff] 0.0
  %411 = vst [vmem:[#allocation3 + $0x18] sm:$0xff] 0.0
  %412 = vst [vmem:[#allocation3 + $0x20] sm:$0xff] 0.0
  %413 = vst [vmem:[#allocation3 + $0x28] sm:$0xff] 0.0
  %414 = vst [vmem:[#allocation3 + $0x30] sm:$0xff] 0.0
  %415 = vst [vmem:[#allocation3 + $0x38] sm:$0xff] 0.0
  %416 = vst [vmem:[#allocation3 + $0x40] sm:$0xff] 0.0
  %417 = vst [vmem:[#allocation3 + $0x48] sm:$0xff] 0.0
  %418 = vst [vmem:[#allocation3 + $0x50] sm:$0xff] 0.0
  %419 = vst [vmem:[#allocation3 + $0x58] sm:$0xff] 0.0
  %420 = vst [vmem:[#allocation3 + $0x60] sm:$0xff] 0.0
  %421 = vst [vmem:[#allocation3 + $0x68] sm:$0xff] 0.0
  %422 = vst [vmem:[#allocation3 + $0x70] sm:$0xff] 0.0
  %423 = vst [vmem:[#allocation3 + $0x78] sm:$0xff] 0.0
  %424 = vst [vmem:[#allocation3 + $0x80] sm:$0xff] 0.0
  %425 = vst [vmem:[#allocation3 + $0x88] sm:$0xff] 0.0
  %426 = vst [vmem:[#allocation3 + $0x90] sm:$0xff] 0.0
  %427 = vst [vmem:[#allocation3 + $0x98] sm:$0xff] 0.0
  %428 = vst [vmem:[#allocation3 + $0xa0] sm:$0xff] 0.0
  %429 = vst [vmem:[#allocation3 + $0xa8] sm:$0xff] 0.0
  %430 = vst [vmem:[#allocation3 + $0xb0] sm:$0xff] 0.0
  %431 = vst [vmem:[#allocation3 + $0xb8] sm:$0xff] 0.0
  %432 = vst [vmem:[#allocation3 + $0xc0] sm:$0xff] 0.0
  %433 = vst [vmem:[#allocation3 + $0xc8] sm:$0xff] 0.0
  %434 = vst [vmem:[#allocation3 + $0xd0] sm:$0xff] 0.0
  %435 = vst [vmem:[#allocation3 + $0xd8] sm:$0xff] 0.0
  %436 = vst [vmem:[#allocation3 + $0xe0] sm:$0xff] 0.0
  %437 = vst [vmem:[#allocation3 + $0xe8] sm:$0xff] 0.0
  %438 = vst [vmem:[#allocation3 + $0xf0] sm:$0xff] 0.0
  %439 = vst [vmem:[#allocation3 + $0xf8] sm:$0xff] 0.0
  %440 = vst [vmem:[#allocation4] sm:$0xff] 0.0
  %441 = vst [vmem:[#allocation4 + $0x8] sm:$0xff] 0.0
  %442 = vst [vmem:[#allocation4 + $0x10] sm:$0xff] 0.0
  %443 = vst [vmem:[#allocation4 + $0x18] sm:$0xff] 0.0
  %444 = vst [vmem:[#allocation4 + $0x20] sm:$0xff] 0.0
  %445 = vst [vmem:[#allocation4 + $0x28] sm:$0xff] 0.0
  %446 = vst [vmem:[#allocation4 + $0x30] sm:$0xff] 0.0
  %447 = vst [vmem:[#allocation4 + $0x38] sm:$0xff] 0.0
  %448 = vst [vmem:[#allocation4 + $0x40] sm:$0xff] 0.0
  %449 = vst [vmem:[#allocation4 + $0x48] sm:$0xff] 0.0
  %450 = vst [vmem:[#allocation4 + $0x50] sm:$0xff] 0.0
  %451 = vst [vmem:[#allocation4 + $0x58] sm:$0xff] 0.0
  %452 = vst [vmem:[#allocation4 + $0x60] sm:$0xff] 0.0
  %453 = vst [vmem:[#allocation4 + $0x68] sm:$0xff] 0.0
  %454 = vst [vmem:[#allocation4 + $0x70] sm:$0xff] 0.0
  %455 = vst [vmem:[#allocation4 + $0x78] sm:$0xff] 0.0
  %456 = vst [vmem:[#allocation4 + $0x80] sm:$0xff] 0.0
  %457 = vst [vmem:[#allocation4 + $0x88] sm:$0xff] 0.0
  %458 = vst [vmem:[#allocation4 + $0x90] sm:$0xff] 0.0
  %459 = vst [vmem:[#allocation4 + $0x98] sm:$0xff] 0.0
  %460 = vst [vmem:[#allocation4 + $0xa0] sm:$0xff] 0.0
  %461 = vst [vmem:[#allocation4 + $0xa8] sm:$0xff] 0.0
  %462 = vst [vmem:[#allocation4 + $0xb0] sm:$0xff] 0.0
  %463 = vst [vmem:[#allocation4 + $0xb8] sm:$0xff] 0.0
  %464 = vst [vmem:[#allocation4 + $0xc0] sm:$0xff] 0.0
  %465 = vst [vmem:[#allocation4 + $0xc8] sm:$0xff] 0.0
  %466 = vst [vmem:[#allocation4 + $0xd0] sm:$0xff] 0.0
  %467 = vst [vmem:[#allocation4 + $0xd8] sm:$0xff] 0.0
  %468 = vst [vmem:[#allocation4 + $0xe0] sm:$0xff] 0.0
  %469 = vst [vmem:[#allocation4 + $0xe8] sm:$0xff] 0.0
  %470 = vst [vmem:[#allocation4 + $0xf0] sm:$0xff] 0.0
  %471 = vst [vmem:[#allocation4 + $0xf8] sm:$0xff] 0.0
  loop: start=0, step=1, limit=40
  $region18: #{binarize_sparse_code_forward.1} parent=0 // loop_pre_header
    _
  $region19: #{binarize_sparse_code_forward.1} parent=0 // loop_header
    %s473 = sphi 0, %s477
    %p474 = scmp.ge.s32.totalorder %s473, 40
    %s478 = sphi 1.0, %s1040
  $region20: #{binarize_sparse_code_forward.1} parent=0 // loop_header_branch
    %476 = sbr.rel (%p474) target = $region24
  $region21: #{binarize_sparse_code_forward.1} parent=0 // loop_body
    %v479 = vld [vmem:[%s0] sm:$0xff]
    %v480 = vld [vmem:[%s0 + $0x8] sm:$0xff]
    %v481 = vld [vmem:[%s0 + $0x10] sm:$0xff]
    %v482 = vld [vmem:[%s0 + $0x18] sm:$0xff]
    %v483 = vld [vmem:[%s0 + $0x20] sm:$0xff]
    %v484 = vld [vmem:[%s0 + $0x28] sm:$0xff]
    %v485 = vld [vmem:[%s0 + $0x30] sm:$0xff]
    %v486 = vld [vmem:[%s0 + $0x38] sm:$0xff]
    %v487 = vld [vmem:[%s0 + $0x40] sm:$0xff]
    %v488 = vld [vmem:[%s0 + $0x48] sm:$0xff]
    %v489 = vld [vmem:[%s0 + $0x50] sm:$0xff]
    %v490 = vld [vmem:[%s0 + $0x58] sm:$0xff]
    %v491 = vld [vmem:[%s0 + $0x60] sm:$0xff]
    %v492 = vld [vmem:[%s0 + $0x68] sm:$0xff]
    %v493 = vld [vmem:[%s0 + $0x70] sm:$0xff]
    %v494 = vld [vmem:[%s0 + $0x78] sm:$0xff]
    %v495 = vld [vmem:[%s0 + $0x80] sm:$0xff]
    %v496 = vld [vmem:[%s0 + $0x88] sm:$0xff]
    %v497 = vld [vmem:[%s0 + $0x90] sm:$0xff]
    %v498 = vld [vmem:[%s0 + $0x98] sm:$0xff]
    %v499 = vld [vmem:[%s0 + $0xa0] sm:$0xff]
    %v500 = vld [vmem:[%s0 + $0xa8] sm:$0xff]
    %v501 = vld [vmem:[%s0 + $0xb0] sm:$0xff]
    %v502 = vld [vmem:[%s0 + $0xb8] sm:$0xff]
    %v503 = vld [vmem:[%s0 + $0xc0] sm:$0xff]
    %v504 = vld [vmem:[%s0 + $0xc8] sm:$0xff]
    %v505 = vld [vmem:[%s0 + $0xd0] sm:$0xff]
    %v506 = vld [vmem:[%s0 + $0xd8] sm:$0xff]
    %v507 = vld [vmem:[%s0 + $0xe0] sm:$0xff]
    %v508 = vld [vmem:[%s0 + $0xe8] sm:$0xff]
    %v509 = vld [vmem:[%s0 + $0xf0] sm:$0xff]
    %v510 = vld [vmem:[%s0 + $0xf8] sm:$0xff]
    %v511 = vld [vmem:[%s0 + $0x100] sm:$0xff]
    %v512 = vld [vmem:[%s0 + $0x108] sm:$0xff]
    %v513 = vld [vmem:[%s0 + $0x110] sm:$0xff]
    %v514 = vld [vmem:[%s0 + $0x118] sm:$0xff]
    %v515 = vld [vmem:[%s0 + $0x120] sm:$0xff]
    %v516 = vld [vmem:[%s0 + $0x128] sm:$0xff]
    %v517 = vld [vmem:[%s0 + $0x130] sm:$0xff]
    %v518 = vld [vmem:[%s0 + $0x138] sm:$0xff]
    %v519 = vld [vmem:[%s0 + $0x140] sm:$0xff]
    %v520 = vld [vmem:[%s0 + $0x148] sm:$0xff]
    %v521 = vld [vmem:[%s0 + $0x150] sm:$0xff]
    %v522 = vld [vmem:[%s0 + $0x158] sm:$0xff]
    %v523 = vld [vmem:[%s0 + $0x160] sm:$0xff]
    %v524 = vld [vmem:[%s0 + $0x168] sm:$0xff]
    %v525 = vld [vmem:[%s0 + $0x170] sm:$0xff]
    %v526 = vld [vmem:[%s0 + $0x178] sm:$0xff]
    %v527 = vld [vmem:[%s0 + $0x180] sm:$0xff]
    %v528 = vld [vmem:[%s0 + $0x188] sm:$0xff]
    %v529 = vld [vmem:[%s0 + $0x190] sm:$0xff]
    %v530 = vld [vmem:[%s0 + $0x198] sm:$0xff]
    %v531 = vld [vmem:[%s0 + $0x1a0] sm:$0xff]
    %v532 = vld [vmem:[%s0 + $0x1a8] sm:$0xff]
    %v533 = vld [vmem:[%s0 + $0x1b0] sm:$0xff]
    %v534 = vld [vmem:[%s0 + $0x1b8] sm:$0xff]
    %v535 = vld [vmem:[%s0 + $0x1c0] sm:$0xff]
    %v536 = vld [vmem:[%s0 + $0x1c8] sm:$0xff]
    %v537 = vld [vmem:[%s0 + $0x1d0] sm:$0xff]
    %v538 = vld [vmem:[%s0 + $0x1d8] sm:$0xff]
    %v539 = vld [vmem:[%s0 + $0x1e0] sm:$0xff]
    %v540 = vld [vmem:[%s0 + $0x1e8] sm:$0xff]
    %v541 = vld [vmem:[%s0 + $0x1f0] sm:$0xff]
    %v542 = vld [vmem:[%s0 + $0x1f8] sm:$0xff]
    %v543 = vld [vmem:[#allocation4] sm:$0xff]
    %v544 = vld [vmem:[#allocation4 + $0x8] sm:$0xff]
    %v545 = vld [vmem:[#allocation4 + $0x10] sm:$0xff]
    %v546 = vld [vmem:[#allocation4 + $0x18] sm:$0xff]
    %v547 = vld [vmem:[#allocation4 + $0x20] sm:$0xff]
    %v548 = vld [vmem:[#allocation4 + $0x28] sm:$0xff]
    %v549 = vld [vmem:[#allocation4 + $0x30] sm:$0xff]
    %v550 = vld [vmem:[#allocation4 + $0x38] sm:$0xff]
    %v551 = vld [vmem:[#allocation4 + $0x40] sm:$0xff]
    %v552 = vld [vmem:[#allocation4 + $0x48] sm:$0xff]
    %v553 = vld [vmem:[#allocation4 + $0x50] sm:$0xff]
    %v554 = vld [vmem:[#allocation4 + $0x58] sm:$0xff]
    %v555 = vld [vmem:[#allocation4 + $0x60] sm:$0xff]
    %v556 = vld [vmem:[#allocation4 + $0x68] sm:$0xff]
    %v557 = vld [vmem:[#allocation4 + $0x70] sm:$0xff]
    %v558 = vld [vmem:[#allocation4 + $0x78] sm:$0xff]
    %v559 = vld [vmem:[#allocation4 + $0x80] sm:$0xff]
    %v560 = vld [vmem:[#allocation4 + $0x88] sm:$0xff]
    %v561 = vld [vmem:[#allocation4 + $0x90] sm:$0xff]
    %v562 = vld [vmem:[#allocation4 + $0x98] sm:$0xff]
    %v563 = vld [vmem:[#allocation4 + $0xa0] sm:$0xff]
    %v564 = vld [vmem:[#allocation4 + $0xa8] sm:$0xff]
    %v565 = vld [vmem:[#allocation4 + $0xb0] sm:$0xff]
    %v566 = vld [vmem:[#allocation4 + $0xb8] sm:$0xff]
    %v567 = vld [vmem:[#allocation4 + $0xc0] sm:$0xff]
    %v568 = vld [vmem:[#allocation4 + $0xc8] sm:$0xff]
    %v569 = vld [vmem:[#allocation4 + $0xd0] sm:$0xff]
    %v570 = vld [vmem:[#allocation4 + $0xd8] sm:$0xff]
    %v571 = vld [vmem:[#allocation4 + $0xe0] sm:$0xff]
    %v572 = vld [vmem:[#allocation4 + $0xe8] sm:$0xff]
    %v573 = vld [vmem:[#allocation4 + $0xf0] sm:$0xff]
    %v574 = vld [vmem:[#allocation4 + $0xf8] sm:$0xff]
    %v575 = vld [vmem:[#allocation2] sm:$0xff]
    %v576 = vld [vmem:[#allocation2 + $0x8] sm:$0xff]
    %v577 = vld [vmem:[#allocation2 + $0x10] sm:$0xff]
    %v578 = vld [vmem:[#allocation2 + $0x18] sm:$0xff]
    %v579 = vld [vmem:[#allocation2 + $0x20] sm:$0xff]
    %v580 = vld [vmem:[#allocation2 + $0x28] sm:$0xff]
    %v581 = vld [vmem:[#allocation2 + $0x30] sm:$0xff]
    %v582 = vld [vmem:[#allocation2 + $0x38] sm:$0xff]
    %v583 = vld [vmem:[#allocation2 + $0x40] sm:$0xff]
    %v584 = vld [vmem:[#allocation2 + $0x48] sm:$0xff]
    %v585 = vld [vmem:[#allocation2 + $0x50] sm:$0xff]
    %v586 = vld [vmem:[#allocation2 + $0x58] sm:$0xff]
    %v587 = vld [vmem:[#allocation2 + $0x60] sm:$0xff]
    %v588 = vld [vmem:[#allocation2 + $0x68] sm:$0xff]
    %v589 = vld [vmem:[#allocation2 + $0x70] sm:$0xff]
    %v590 = vld [vmem:[#allocation2 + $0x78] sm:$0xff]
    %v591 = vld [vmem:[#allocation2 + $0x80] sm:$0xff]
    %v592 = vld [vmem:[#allocation2 + $0x88] sm:$0xff]
    %v593 = vld [vmem:[#allocation2 + $0x90] sm:$0xff]
    %v594 = vld [vmem:[#allocation2 + $0x98] sm:$0xff]
    %v595 = vld [vmem:[#allocation2 + $0xa0] sm:$0xff]
    %v596 = vld [vmem:[#allocation2 + $0xa8] sm:$0xff]
    %v597 = vld [vmem:[#allocation2 + $0xb0] sm:$0xff]
    %v598 = vld [vmem:[#allocation2 + $0xb8] sm:$0xff]
    %v599 = vld [vmem:[#allocation2 + $0xc0] sm:$0xff]
    %v600 = vld [vmem:[#allocation2 + $0xc8] sm:$0xff]
    %v601 = vld [vmem:[#allocation2 + $0xd0] sm:$0xff]
    %v602 = vld [vmem:[#allocation2 + $0xd8] sm:$0xff]
    %v603 = vld [vmem:[#allocation2 + $0xe0] sm:$0xff]
    %v604 = vld [vmem:[#allocation2 + $0xe8] sm:$0xff]
    %v605 = vld [vmem:[#allocation2 + $0xf0] sm:$0xff]
    %v606 = vld [vmem:[#allocation2 + $0xf8] sm:$0xff]
    %607 = vmatprep.subr.mxu0 0.0
    %608 = vmatpush1.msra.mxu0 %v543
    %609 = vmatprep.subr.mxu0 0.0
    %610 = vmatpush1.msra.mxu0 %v544
    %611 = vmatprep.subr.mxu0 0.0
    %612 = vmatpush1.msra.mxu0 %v545
    %613 = vmatprep.subr.mxu0 0.0
    %614 = vmatpush1.msra.mxu0 %v546
    %615 = vmatprep.subr.mxu0 0.0
    %616 = vmatpush1.msra.mxu0 %v547
    %617 = vmatprep.subr.mxu0 0.0
    %618 = vmatpush1.msra.mxu0 %v548
    %619 = vmatprep.subr.mxu0 0.0
    %620 = vmatpush1.msra.mxu0 %v549
    %621 = vmatprep.subr.mxu0 0.0
    %622 = vmatpush1.msra.mxu0 %v550
    %623 = vmatprep.subr.mxu0 0.0
    %624 = vmatpush1.msra.mxu0 %v551
    %625 = vmatprep.subr.mxu0 0.0
    %626 = vmatpush1.msra.mxu0 %v552
    %627 = vmatprep.subr.mxu0 0.0
    %628 = vmatpush1.msra.mxu0 %v553
    %629 = vmatprep.subr.mxu0 0.0
    %630 = vmatpush1.msra.mxu0 %v554
    %631 = vmatprep.subr.mxu0 0.0
    %632 = vmatpush1.msra.mxu0 %v555
    %633 = vmatprep.subr.mxu0 0.0
    %634 = vmatpush1.msra.mxu0 %v556
    %635 = vmatprep.subr.mxu0 0.0
    %636 = vmatpush1.msra.mxu0 %v557
    %637 = vmatprep.subr.mxu0 0.0
    %638 = vmatpush1.msra.mxu0 %v558
    %639 = vmatprep.subr.mxu0 0.0
    %640 = vmatpush1.msra.mxu0 %v559
    %641 = vmatprep.subr.mxu0 0.0
    %642 = vmatpush1.msra.mxu0 %v560
    %643 = vmatprep.subr.mxu0 0.0
    %644 = vmatpush1.msra.mxu0 %v561
    %645 = vmatprep.subr.mxu0 0.0
    %646 = vmatpush1.msra.mxu0 %v562
    %647 = vmatprep.subr.mxu0 0.0
    %648 = vmatpush1.msra.mxu0 %v563
    %649 = vmatprep.subr.mxu0 0.0
    %650 = vmatpush1.msra.mxu0 %v564
    %651 = vmatprep.subr.mxu0 0.0
    %652 = vmatpush1.msra.mxu0 %v565
    %653 = vmatprep.subr.mxu0 0.0
    %654 = vmatpush1.msra.mxu0 %v566
    %655 = vmatprep.subr.mxu0 0.0
    %656 = vmatpush1.msra.mxu0 %v567
    %657 = vmatprep.subr.mxu0 0.0
    %658 = vmatpush1.msra.mxu0 %v568
    %659 = vmatprep.subr.mxu0 0.0
    %660 = vmatpush1.msra.mxu0 %v569
    %661 = vmatprep.subr.mxu0 0.0
    %662 = vmatpush1.msra.mxu0 %v570
    %663 = vmatprep.subr.mxu0 0.0
    %664 = vmatpush1.msra.mxu0 %v571
    %665 = vmatprep.subr.mxu0 0.0
    %666 = vmatpush1.msra.mxu0 %v572
    %667 = vmatprep.subr.mxu0 0.0
    %668 = vmatpush1.msra.mxu0 %v573
    %669 = vmatprep.subr.mxu0 0.0
    %670 = vmatpush1.msra.mxu0 %v574
    %671 = vmatprep.mubr.f32.mxu0 %v480
    %672 = vmatmul.mubr.f32.gmra.mrb[0].mxu0 %v479
    %v673 = vpop.f32.mrb[0].mxu0
    %v674 = vadd.f32 %v575, %v673
    %v675 = vpop.f32.mrb[0].mxu0
    %676 = vmatprep.mubr.f32.mxu0 %v482
    %677 = vmatmul.mubr.f32.gmra.mrb[0].mxu0 %v481
    %v678 = vpop.f32.mrb[0].mxu0
    %v679 = vadd.f32 %v576, %v678
    %v680 = vpop.f32.mrb[0].mxu0
    %681 = vmatprep.mubr.f32.mxu0 %v484
    %682 = vmatmul.mubr.f32.gmra.mrb[0].mxu0 %v483
    %v683 = vpop.f32.mrb[0].mxu0
    %v684 = vadd.f32 %v577, %v683
    %v685 = vpop.f32.mrb[0].mxu0
    %686 = vmatprep.mubr.f32.mxu0 %v486
    %687 = vmatmul.mubr.f32.gmra.mrb[0].mxu0 %v485
    %v688 = vpop.f32.mrb[0].mxu0
    %v689 = vadd.f32 %v578, %v688
    %v690 = vpop.f32.mrb[0].mxu0
    %691 = vmatprep.mubr.f32.mxu0 %v488
    %692 = vmatmul.mubr.f32.gmra.mrb[0].mxu0 %v487
    %v693 = vpop.f32.mrb[0].mxu0
    %v694 = vadd.f32 %v579, %v693
    %v695 = vpop.f32.mrb[0].mxu0
    %696 = vmatprep.mubr.f32.mxu0 %v490
    %697 = vmatmul.mubr.f32.gmra.mrb[0].mxu0 %v489
    %v698 = vpop.f32.mrb[0].mxu0
    %v699 = vadd.f32 %v580, %v698
    %v700 = vpop.f32.mrb[0].mxu0
    %701 = vmatprep.mubr.f32.mxu0 %v492
    %702 = vmatmul.mubr.f32.gmra.mrb[0].mxu0 %v491
    %v703 = vpop.f32.mrb[0].mxu0
    %v704 = vadd.f32 %v581, %v703
    %v705 = vpop.f32.mrb[0].mxu0
    %706 = vmatprep.mubr.f32.mxu0 %v494
    %707 = vmatmul.mubr.f32.gmra.mrb[0].mxu0 %v493
    %v708 = vpop.f32.mrb[0].mxu0
    %v709 = vadd.f32 %v582, %v708
    %v710 = vpop.f32.mrb[0].mxu0
    %711 = vmatprep.mubr.f32.mxu0 %v496
    %712 = vmatmul.mubr.f32.gmra.mrb[0].mxu0 %v495
    %v713 = vpop.f32.mrb[0].mxu0
    %v714 = vadd.f32 %v583, %v713
    %v715 = vpop.f32.mrb[0].mxu0
    %716 = vmatprep.mubr.f32.mxu0 %v498
    %717 = vmatmul.mubr.f32.gmra.mrb[0].mxu0 %v497
    %v718 = vpop.f32.mrb[0].mxu0
    %v719 = vadd.f32 %v584, %v718
    %v720 = vpop.f32.mrb[0].mxu0
    %721 = vmatprep.mubr.f32.mxu0 %v500
    %722 = vmatmul.mubr.f32.gmra.mrb[0].mxu0 %v499
    %v723 = vpop.f32.mrb[0].mxu0
    %v724 = vadd.f32 %v585, %v723
    %v725 = vpop.f32.mrb[0].mxu0
    %726 = vmatprep.mubr.f32.mxu0 %v502
    %727 = vmatmul.mubr.f32.gmra.mrb[0].mxu0 %v501
    %v728 = vpop.f32.mrb[0].mxu0
    %v729 = vadd.f32 %v586, %v728
    %v730 = vpop.f32.mrb[0].mxu0
    %731 = vmatprep.mubr.f32.mxu0 %v504
    %732 = vmatmul.mubr.f32.gmra.mrb[0].mxu0 %v503
    %v733 = vpop.f32.mrb[0].mxu0
    %v734 = vadd.f32 %v587, %v733
    %v735 = vpop.f32.mrb[0].mxu0
    %736 = vmatprep.mubr.f32.mxu0 %v506
    %737 = vmatmul.mubr.f32.gmra.mrb[0].mxu0 %v505
    %v738 = vpop.f32.mrb[0].mxu0
    %v739 = vadd.f32 %v588, %v738
    %v740 = vpop.f32.mrb[0].mxu0
    %741 = vmatprep.mubr.f32.mxu0 %v508
    %742 = vmatmul.mubr.f32.gmra.mrb[0].mxu0 %v507
    %v743 = vpop.f32.mrb[0].mxu0
    %v744 = vadd.f32 %v589, %v743
    %v745 = vpop.f32.mrb[0].mxu0
    %746 = vmatprep.mubr.f32.mxu0 %v510
    %747 = vmatmul.mubr.f32.gmra.mrb[0].mxu0 %v509
    %v748 = vpop.f32.mrb[0].mxu0
    %v749 = vadd.f32 %v590, %v748
    %v750 = vpop.f32.mrb[0].mxu0
    %751 = vmatprep.mubr.f32.mxu0 %v512
    %752 = vmatmul.mubr.f32.gmra.mrb[0].mxu0 %v511
    %v753 = vpop.f32.mrb[0].mxu0
    %v754 = vadd.f32 %v591, %v753
    %v755 = vpop.f32.mrb[0].mxu0
    %756 = vmatprep.mubr.f32.mxu0 %v514
    %757 = vmatmul.mubr.f32.gmra.mrb[0].mxu0 %v513
    %v758 = vpop.f32.mrb[0].mxu0
    %v759 = vadd.f32 %v592, %v758
    %v760 = vpop.f32.mrb[0].mxu0
    %761 = vmatprep.mubr.f32.mxu0 %v516
    %762 = vmatmul.mubr.f32.gmra.mrb[0].mxu0 %v515
    %v763 = vpop.f32.mrb[0].mxu0
    %v764 = vadd.f32 %v593, %v763
    %v765 = vpop.f32.mrb[0].mxu0
    %766 = vmatprep.mubr.f32.mxu0 %v518
    %767 = vmatmul.mubr.f32.gmra.mrb[0].mxu0 %v517
    %v768 = vpop.f32.mrb[0].mxu0
    %v769 = vadd.f32 %v594, %v768
    %v770 = vpop.f32.mrb[0].mxu0
    %771 = vmatprep.mubr.f32.mxu0 %v520
    %772 = vmatmul.mubr.f32.gmra.mrb[0].mxu0 %v519
    %v773 = vpop.f32.mrb[0].mxu0
    %v774 = vadd.f32 %v595, %v773
    %v775 = vpop.f32.mrb[0].mxu0
    %776 = vmatprep.mubr.f32.mxu0 %v522
    %777 = vmatmul.mubr.f32.gmra.mrb[0].mxu0 %v521
    %v778 = vpop.f32.mrb[0].mxu0
    %v779 = vadd.f32 %v596, %v778
    %v780 = vpop.f32.mrb[0].mxu0
    %781 = vmatprep.mubr.f32.mxu0 %v524
    %782 = vmatmul.mubr.f32.gmra.mrb[0].mxu0 %v523
    %v783 = vpop.f32.mrb[0].mxu0
    %v784 = vadd.f32 %v597, %v783
    %v785 = vpop.f32.mrb[0].mxu0
    %786 = vmatprep.mubr.f32.mxu0 %v526
    %787 = vmatmul.mubr.f32.gmra.mrb[0].mxu0 %v525
    %v788 = vpop.f32.mrb[0].mxu0
    %v789 = vadd.f32 %v598, %v788
    %v790 = vpop.f32.mrb[0].mxu0
    %791 = vmatprep.mubr.f32.mxu0 %v528
    %792 = vmatmul.mubr.f32.gmra.mrb[0].mxu0 %v527
    %v793 = vpop.f32.mrb[0].mxu0
    %v794 = vadd.f32 %v599, %v793
    %v795 = vpop.f32.mrb[0].mxu0
    %796 = vmatprep.mubr.f32.mxu0 %v530
    %797 = vmatmul.mubr.f32.gmra.mrb[0].mxu0 %v529
    %v798 = vpop.f32.mrb[0].mxu0
    %v799 = vadd.f32 %v600, %v798
    %v800 = vpop.f32.mrb[0].mxu0
    %801 = vmatprep.mubr.f32.mxu0 %v532
    %802 = vmatmul.mubr.f32.gmra.mrb[0].mxu0 %v531
    %v803 = vpop.f32.mrb[0].mxu0
    %v804 = vadd.f32 %v601, %v803
    %v805 = vpop.f32.mrb[0].mxu0
    %806 = vmatprep.mubr.f32.mxu0 %v534
    %807 = vmatmul.mubr.f32.gmra.mrb[0].mxu0 %v533
    %v808 = vpop.f32.mrb[0].mxu0
    %v809 = vadd.f32 %v602, %v808
    %v810 = vpop.f32.mrb[0].mxu0
    %811 = vmatprep.mubr.f32.mxu0 %v536
    %812 = vmatmul.mubr.f32.gmra.mrb[0].mxu0 %v535
    %v813 = vpop.f32.mrb[0].mxu0
    %v814 = vadd.f32 %v603, %v813
    %v815 = vpop.f32.mrb[0].mxu0
    %816 = vmatprep.mubr.f32.mxu0 %v538
    %817 = vmatmul.mubr.f32.gmra.mrb[0].mxu0 %v537
    %v818 = vpop.f32.mrb[0].mxu0
    %v819 = vadd.f32 %v604, %v818
    %v820 = vpop.f32.mrb[0].mxu0
    %821 = vmatprep.mubr.f32.mxu0 %v540
    %822 = vmatmul.mubr.f32.gmra.mrb[0].mxu0 %v539
    %v823 = vpop.f32.mrb[0].mxu0
    %v824 = vadd.f32 %v605, %v823
    %v825 = vpop.f32.mrb[0].mxu0
    %826 = vmatprep.mubr.f32.mxu0 %v542
    %827 = vmatmul.mubr.f32.gmra.mrb[0].mxu0 %v541
    %v828 = vpop.f32.mrb[0].mxu0
    %v829 = vadd.f32 %v606, %v828
    %v830 = vpop.f32.mrb[0].mxu0
    %831 = vdwg.mxu0
    %v832 = vstv %s20
    %vm833 = vcmp.gt.f32.partialorder %v674, %v832
    %vm834 = vcmp.gt.f32.partialorder %v679, %v832
    %vm835 = vcmp.gt.f32.partialorder %v684, %v832
    %vm836 = vcmp.gt.f32.partialorder %v689, %v832
    %vm837 = vcmp.gt.f32.partialorder %v694, %v832
    %vm838 = vcmp.gt.f32.partialorder %v699, %v832
    %vm839 = vcmp.gt.f32.partialorder %v704, %v832
    %vm840 = vcmp.gt.f32.partialorder %v709, %v832
    %vm841 = vcmp.gt.f32.partialorder %v714, %v832
    %vm842 = vcmp.gt.f32.partialorder %v719, %v832
    %vm843 = vcmp.gt.f32.partialorder %v724, %v832
    %vm844 = vcmp.gt.f32.partialorder %v729, %v832
    %vm845 = vcmp.gt.f32.partialorder %v734, %v832
    %vm846 = vcmp.gt.f32.partialorder %v739, %v832
    %vm847 = vcmp.gt.f32.partialorder %v744, %v832
    %vm848 = vcmp.gt.f32.partialorder %v749, %v832
    %vm849 = vcmp.gt.f32.partialorder %v754, %v832
    %vm850 = vcmp.gt.f32.partialorder %v759, %v832
    %vm851 = vcmp.gt.f32.partialorder %v764, %v832
    %vm852 = vcmp.gt.f32.partialorder %v769, %v832
    %vm853 = vcmp.gt.f32.partialorder %v774, %v832
    %vm854 = vcmp.gt.f32.partialorder %v779, %v832
    %vm855 = vcmp.gt.f32.partialorder %v784, %v832
    %vm856 = vcmp.gt.f32.partialorder %v789, %v832
    %vm857 = vcmp.gt.f32.partialorder %v794, %v832
    %vm858 = vcmp.gt.f32.partialorder %v799, %v832
    %vm859 = vcmp.gt.f32.partialorder %v804, %v832
    %vm860 = vcmp.gt.f32.partialorder %v809, %v832
    %vm861 = vcmp.gt.f32.partialorder %v814, %v832
    %vm862 = vcmp.gt.f32.partialorder %v819, %v832
    %vm863 = vcmp.gt.f32.partialorder %v824, %v832
    %vm864 = vcmp.gt.f32.partialorder %v829, %v832
    %v865 = vsub.f32 %v674, %v832
    %v866 = vsub.f32 %v679, %v832
    %v867 = vsub.f32 %v684, %v832
    %v868 = vsub.f32 %v689, %v832
    %v869 = vsub.f32 %v694, %v832
    %v870 = vsub.f32 %v699, %v832
    %v871 = vsub.f32 %v704, %v832
    %v872 = vsub.f32 %v709, %v832
    %v873 = vsub.f32 %v714, %v832
    %v874 = vsub.f32 %v719, %v832
    %v875 = vsub.f32 %v724, %v832
    %v876 = vsub.f32 %v729, %v832
    %v877 = vsub.f32 %v734, %v832
    %v878 = vsub.f32 %v739, %v832
    %v879 = vsub.f32 %v744, %v832
    %v880 = vsub.f32 %v749, %v832
    %v881 = vsub.f32 %v754, %v832
    %v882 = vsub.f32 %v759, %v832
    %v883 = vsub.f32 %v764, %v832
    %v884 = vsub.f32 %v769, %v832
    %v885 = vsub.f32 %v774, %v832
    %v886 = vsub.f32 %v779, %v832
    %v887 = vsub.f32 %v784, %v832
    %v888 = vsub.f32 %v789, %v832
    %v889 = vsub.f32 %v794, %v832
    %v890 = vsub.f32 %v799, %v832
    %v891 = vsub.f32 %v804, %v832
    %v892 = vsub.f32 %v809, %v832
    %v893 = vsub.f32 %v814, %v832
    %v894 = vsub.f32 %v819, %v832
    %v895 = vsub.f32 %v824, %v832
    %v896 = vsub.f32 %v829, %v832
    %s897 = ssub.f32 0.0, %s20
    %v898 = vstv %s897
    %vm899 = vcmp.lt.f32.partialorder %v674, %v898
    %vm900 = vcmp.lt.f32.partialorder %v679, %v898
    %vm901 = vcmp.lt.f32.partialorder %v684, %v898
    %vm902 = vcmp.lt.f32.partialorder %v689, %v898
    %vm903 = vcmp.lt.f32.partialorder %v694, %v898
    %vm904 = vcmp.lt.f32.partialorder %v699, %v898
    %vm905 = vcmp.lt.f32.partialorder %v704, %v898
    %vm906 = vcmp.lt.f32.partialorder %v709, %v898
    %vm907 = vcmp.lt.f32.partialorder %v714, %v898
    %vm908 = vcmp.lt.f32.partialorder %v719, %v898
    %vm909 = vcmp.lt.f32.partialorder %v724, %v898
    %vm910 = vcmp.lt.f32.partialorder %v729, %v898
    %vm911 = vcmp.lt.f32.partialorder %v734, %v898
    %vm912 = vcmp.lt.f32.partialorder %v739, %v898
    %vm913 = vcmp.lt.f32.partialorder %v744, %v898
    %vm914 = vcmp.lt.f32.partialorder %v749, %v898
    %vm915 = vcmp.lt.f32.partialorder %v754, %v898
    %vm916 = vcmp.lt.f32.partialorder %v759, %v898
    %vm917 = vcmp.lt.f32.partialorder %v764, %v898
    %vm918 = vcmp.lt.f32.partialorder %v769, %v898
    %vm919 = vcmp.lt.f32.partialorder %v774, %v898
    %vm920 = vcmp.lt.f32.partialorder %v779, %v898
    %vm921 = vcmp.lt.f32.partialorder %v784, %v898
    %vm922 = vcmp.lt.f32.partialorder %v789, %v898
    %vm923 = vcmp.lt.f32.partialorder %v794, %v898
    %vm924 = vcmp.lt.f32.partialorder %v799, %v898
    %vm925 = vcmp.lt.f32.partialorder %v804, %v898
    %vm926 = vcmp.lt.f32.partialorder %v809, %v898
    %vm927 = vcmp.lt.f32.partialorder %v814, %v898
    %vm928 = vcmp.lt.f32.partialorder %v819, %v898
    %vm929 = vcmp.lt.f32.partialorder %v824, %v898
    %vm930 = vcmp.lt.f32.partialorder %v829, %v898
    %v931 = vadd.f32 %v674, %v832
    %v932 = vadd.f32 %v679, %v832
    %v933 = vadd.f32 %v684, %v832
    %v934 = vadd.f32 %v689, %v832
    %v935 = vadd.f32 %v694, %v832
    %v936 = vadd.f32 %v699, %v832
    %v937 = vadd.f32 %v704, %v832
    %v938 = vadd.f32 %v709, %v832
    %v939 = vadd.f32 %v714, %v832
    %v940 = vadd.f32 %v719, %v832
    %v941 = vadd.f32 %v724, %v832
    %v942 = vadd.f32 %v729, %v832
    %v943 = vadd.f32 %v734, %v832
    %v944 = vadd.f32 %v739, %v832
    %v945 = vadd.f32 %v744, %v832
    %v946 = vadd.f32 %v749, %v832
    %v947 = vadd.f32 %v754, %v832
    %v948 = vadd.f32 %v759, %v832
    %v949 = vadd.f32 %v764, %v832
    %v950 = vadd.f32 %v769, %v832
    %v951 = vadd.f32 %v774, %v832
    %v952 = vadd.f32 %v779, %v832
    %v953 = vadd.f32 %v784, %v832
    %v954 = vadd.f32 %v789, %v832
    %v955 = vadd.f32 %v794, %v832
    %v956 = vadd.f32 %v799, %v832
    %v957 = vadd.f32 %v804, %v832
    %v958 = vadd.f32 %v809, %v832
    %v959 = vadd.f32 %v814, %v832
    %v960 = vadd.f32 %v819, %v832
    %v961 = vadd.f32 %v824, %v832
    %v962 = vadd.f32 %v829, %v832
    %v963 = vsel %vm899, %v931, 0.0
    %v964 = vsel %vm900, %v932, 0.0
    %v965 = vsel %vm901, %v933, 0.0
    %v966 = vsel %vm902, %v934, 0.0
    %v967 = vsel %vm903, %v935, 0.0
    %v968 = vsel %vm904, %v936, 0.0
    %v969 = vsel %vm905, %v937, 0.0
    %v970 = vsel %vm906, %v938, 0.0
    %v971 = vsel %vm907, %v939, 0.0
    %v972 = vsel %vm908, %v940, 0.0
    %v973 = vsel %vm909, %v941, 0.0
    %v974 = vsel %vm910, %v942, 0.0
    %v975 = vsel %vm911, %v943, 0.0
    %v976 = vsel %vm912, %v944, 0.0
    %v977 = vsel %vm913, %v945, 0.0
    %v978 = vsel %vm914, %v946, 0.0
    %v979 = vsel %vm915, %v947, 0.0
    %v980 = vsel %vm916, %v948, 0.0
    %v981 = vsel %vm917, %v949, 0.0
    %v982 = vsel %vm918, %v950, 0.0
    %v983 = vsel %vm919, %v951, 0.0
    %v984 = vsel %vm920, %v952, 0.0
    %v985 = vsel %vm921, %v953, 0.0
    %v986 = vsel %vm922, %v954, 0.0
    %v987 = vsel %vm923, %v955, 0.0
    %v988 = vsel %vm924, %v956, 0.0
    %v989 = vsel %vm925, %v957, 0.0
    %v990 = vsel %vm926, %v958, 0.0
    %v991 = vsel %vm927, %v959, 0.0
    %v992 = vsel %vm928, %v960, 0.0
    %v993 = vsel %vm929, %v961, 0.0
    %v994 = vsel %vm930, %v962, 0.0
    %v995 = vsel %vm833, %v865, %v963
    %v996 = vsel %vm834, %v866, %v964
    %v997 = vsel %vm835, %v867, %v965
    %v998 = vsel %vm836, %v868, %v966
    %v999 = vsel %vm837, %v869, %v967
    %v1000 = vsel %vm838, %v870, %v968
    %v1001 = vsel %vm839, %v871, %v969
    %v1002 = vsel %vm840, %v872, %v970
    %v1003 = vsel %vm841, %v873, %v971
    %v1004 = vsel %vm842, %v874, %v972
    %v1005 = vsel %vm843, %v875, %v973
    %v1006 = vsel %vm844, %v876, %v974
    %v1007 = vsel %vm845, %v877, %v975
    %v1008 = vsel %vm846, %v878, %v976
    %v1009 = vsel %vm847, %v879, %v977
    %v1010 = vsel %vm848, %v880, %v978
    %v1011 = vsel %vm849, %v881, %v979
    %v1012 = vsel %vm850, %v882, %v980
    %v1013 = vsel %vm851, %v883, %v981
    %v1014 = vsel %vm852, %v884, %v982
    %v1015 = vsel %vm853, %v885, %v983
    %v1016 = vsel %vm854, %v886, %v984
    %v1017 = vsel %vm855, %v887, %v985
    %v1018 = vsel %vm856, %v888, %v986
    %v1019 = vsel %vm857, %v889, %v987
    %v1020 = vsel %vm858, %v890, %v988
    %v1021 = vsel %vm859, %v891, %v989
    %v1022 = vsel %vm860, %v892, %v990
    %v1023 = vsel %vm861, %v893, %v991
    %v1024 = vsel %vm862, %v894, %v992
    %v1025 = vsel %vm863, %v895, %v993
    %v1026 = vsel %vm864, %v896, %v994
    %s1027 = smul.f32 %s478, 4.0
    %s1028 = smul.f32 %s1027, %s478
    %s1029 = sadd.f32 %s1028, 1.0
    %v1030 = vstv %s1029
    %v1031 = vrsqrt.pop %v1030
    %v1032 = vmul.f32 %v1030, %v1031
    %vm1033 = vcmp.eq.f32.partialorder %v1030, inf
    %v1034 = vsel %vm1033, %v1030, %v1032
    %vm1035 = vcmp.eq.f32.partialorder %v1030, 0.0
    %v1036 = vand.u32 %v1030, 2147483648
    %v1037 = vsel %vm1035, %v1036, %v1034
    %s1038 = vtos %v1037
    %s1039 = sadd.f32 %s1038, 1.0
    %s1040 = smul.f32 %s1039, 0.5
    %s1041 = ssub.f32 %s478, 1.0
    %v1042 = vstv %s1040
    %v1043 = vrcp.pop %v1042
    %s1044 = vtos %v1043
    %s1045 = smul.f32 %s1041, %s1044
    %s1046 = sadd.f32 %s1045, 1.0
    %v1047 = vstv %s1046
    %v1048 = vmul.f32 %v1047, %v995
    %v1049 = vmul.f32 %v1047, %v996
    %v1050 = vmul.f32 %v1047, %v997
    %v1051 = vmul.f32 %v1047, %v998
    %v1052 = vmul.f32 %v1047, %v999
    %v1053 = vmul.f32 %v1047, %v1000
    %v1054 = vmul.f32 %v1047, %v1001
    %v1055 = vmul.f32 %v1047, %v1002
    %v1056 = vmul.f32 %v1047, %v1003
    %v1057 = vmul.f32 %v1047, %v1004
    %v1058 = vmul.f32 %v1047, %v1005
    %v1059 = vmul.f32 %v1047, %v1006
    %v1060 = vmul.f32 %v1047, %v1007
    %v1061 = vmul.f32 %v1047, %v1008
    %v1062 = vmul.f32 %v1047, %v1009
    %v1063 = vmul.f32 %v1047, %v1010
    %v1064 = vmul.f32 %v1047, %v1011
    %v1065 = vmul.f32 %v1047, %v1012
    %v1066 = vmul.f32 %v1047, %v1013
    %v1067 = vmul.f32 %v1047, %v1014
    %v1068 = vmul.f32 %v1047, %v1015
    %v1069 = vmul.f32 %v1047, %v1016
    %v1070 = vmul.f32 %v1047, %v1017
    %v1071 = vmul.f32 %v1047, %v1018
    %v1072 = vmul.f32 %v1047, %v1019
    %v1073 = vmul.f32 %v1047, %v1020
    %v1074 = vmul.f32 %v1047, %v1021
    %v1075 = vmul.f32 %v1047, %v1022
    %v1076 = vmul.f32 %v1047, %v1023
    %v1077 = vmul.f32 %v1047, %v1024
    %v1078 = vmul.f32 %v1047, %v1025
    %v1079 = vmul.f32 %v1047, %v1026
    %v1080 = vld [vmem:[#allocation3] sm:$0xff]
    %v1081 = vld [vmem:[#allocation3 + $0x8] sm:$0xff]
    %v1082 = vld [vmem:[#allocation3 + $0x10] sm:$0xff]
    %v1083 = vld [vmem:[#allocation3 + $0x18] sm:$0xff]
    %v1084 = vld [vmem:[#allocation3 + $0x20] sm:$0xff]
    %v1085 = vld [vmem:[#allocation3 + $0x28] sm:$0xff]
    %v1086 = vld [vmem:[#allocation3 + $0x30] sm:$0xff]
    %v1087 = vld [vmem:[#allocation3 + $0x38] sm:$0xff]
    %v1088 = vld [vmem:[#allocation3 + $0x40] sm:$0xff]
    %v1089 = vld [vmem:[#allocation3 + $0x48] sm:$0xff]
    %v1090 = vld [vmem:[#allocation3 + $0x50] sm:$0xff]
    %v1091 = vld [vmem:[#allocation3 + $0x58] sm:$0xff]
    %v1092 = vld [vmem:[#allocation3 + $0x60] sm:$0xff]
    %v1093 = vld [vmem:[#allocation3 + $0x68] sm:$0xff]
    %v1094 = vld [vmem:[#allocation3 + $0x70] sm:$0xff]
    %v1095 = vld [vmem:[#allocation3 + $0x78] sm:$0xff]
    %v1096 = vld [vmem:[#allocation3 + $0x80] sm:$0xff]
    %v1097 = vld [vmem:[#allocation3 + $0x88] sm:$0xff]
    %v1098 = vld [vmem:[#allocation3 + $0x90] sm:$0xff]
    %v1099 = vld [vmem:[#allocation3 + $0x98] sm:$0xff]
    %v1100 = vld [vmem:[#allocation3 + $0xa0] sm:$0xff]
    %v1101 = vld [vmem:[#allocation3 + $0xa8] sm:$0xff]
    %v1102 = vld [vmem:[#allocation3 + $0xb0] sm:$0xff]
    %v1103 = vld [vmem:[#allocation3 + $0xb8] sm:$0xff]
    %v1104 = vld [vmem:[#allocation3 + $0xc0] sm:$0xff]
    %v1105 = vld [vmem:[#allocation3 + $0xc8] sm:$0xff]
    %v1106 = vld [vmem:[#allocation3 + $0xd0] sm:$0xff]
    %v1107 = vld [vmem:[#allocation3 + $0xd8] sm:$0xff]
    %v1108 = vld [vmem:[#allocation3 + $0xe0] sm:$0xff]
    %v1109 = vld [vmem:[#allocation3 + $0xe8] sm:$0xff]
    %v1110 = vld [vmem:[#allocation3 + $0xf0] sm:$0xff]
    %v1111 = vld [vmem:[#allocation3 + $0xf8] sm:$0xff]
    %v1112 = vstv %s1045
    %v1113 = vmul.f32 %v1112, %v1080
    %v1114 = vmul.f32 %v1112, %v1081
    %v1115 = vmul.f32 %v1112, %v1082
    %v1116 = vmul.f32 %v1112, %v1083
    %v1117 = vmul.f32 %v1112, %v1084
    %v1118 = vmul.f32 %v1112, %v1085
    %v1119 = vmul.f32 %v1112, %v1086
    %v1120 = vmul.f32 %v1112, %v1087
    %v1121 = vmul.f32 %v1112, %v1088
    %v1122 = vmul.f32 %v1112, %v1089
    %v1123 = vmul.f32 %v1112, %v1090
    %v1124 = vmul.f32 %v1112, %v1091
    %v1125 = vmul.f32 %v1112, %v1092
    %v1126 = vmul.f32 %v1112, %v1093
    %v1127 = vmul.f32 %v1112, %v1094
    %v1128 = vmul.f32 %v1112, %v1095
    %v1129 = vmul.f32 %v1112, %v1096
    %v1130 = vmul.f32 %v1112, %v1097
    %v1131 = vmul.f32 %v1112, %v1098
    %v1132 = vmul.f32 %v1112, %v1099
    %v1133 = vmul.f32 %v1112, %v1100
    %v1134 = vmul.f32 %v1112, %v1101
    %v1135 = vmul.f32 %v1112, %v1102
    %v1136 = vmul.f32 %v1112, %v1103
    %v1137 = vmul.f32 %v1112, %v1104
    %v1138 = vmul.f32 %v1112, %v1105
    %v1139 = vmul.f32 %v1112, %v1106
    %v1140 = vmul.f32 %v1112, %v1107
    %v1141 = vmul.f32 %v1112, %v1108
    %v1142 = vmul.f32 %v1112, %v1109
    %v1143 = vmul.f32 %v1112, %v1110
    %v1144 = vmul.f32 %v1112, %v1111
    %v1145 = vsub.f32 %v1048, %v1113
    %v1146 = vsub.f32 %v1049, %v1114
    %v1147 = vsub.f32 %v1050, %v1115
    %v1148 = vsub.f32 %v1051, %v1116
    %v1149 = vsub.f32 %v1052, %v1117
    %v1150 = vsub.f32 %v1053, %v1118
    %v1151 = vsub.f32 %v1054, %v1119
    %v1152 = vsub.f32 %v1055, %v1120
    %v1153 = vsub.f32 %v1056, %v1121
    %v1154 = vsub.f32 %v1057, %v1122
    %v1155 = vsub.f32 %v1058, %v1123
    %v1156 = vsub.f32 %v1059, %v1124
    %v1157 = vsub.f32 %v1060, %v1125
    %v1158 = vsub.f32 %v1061, %v1126
    %v1159 = vsub.f32 %v1062, %v1127
    %v1160 = vsub.f32 %v1063, %v1128
    %v1161 = vsub.f32 %v1064, %v1129
    %v1162 = vsub.f32 %v1065, %v1130
    %v1163 = vsub.f32 %v1066, %v1131
    %v1164 = vsub.f32 %v1067, %v1132
    %v1165 = vsub.f32 %v1068, %v1133
    %v1166 = vsub.f32 %v1069, %v1134
    %v1167 = vsub.f32 %v1070, %v1135
    %v1168 = vsub.f32 %v1071, %v1136
    %v1169 = vsub.f32 %v1072, %v1137
    %v1170 = vsub.f32 %v1073, %v1138
    %v1171 = vsub.f32 %v1074, %v1139
    %v1172 = vsub.f32 %v1075, %v1140
    %v1173 = vsub.f32 %v1076, %v1141
    %v1174 = vsub.f32 %v1077, %v1142
    %v1175 = vsub.f32 %v1078, %v1143
    %v1176 = vsub.f32 %v1079, %v1144
    %1177 = vst [vmem:[#allocation4] sm:$0xff] %v1145
    %1178 = vst [vmem:[#allocation4 + $0x8] sm:$0xff] %v1146
    %1179 = vst [vmem:[#allocation4 + $0x10] sm:$0xff] %v1147
    %1180 = vst [vmem:[#allocation4 + $0x18] sm:$0xff] %v1148
    %1181 = vst [vmem:[#allocation4 + $0x20] sm:$0xff] %v1149
    %1182 = vst [vmem:[#allocation4 + $0x28] sm:$0xff] %v1150
    %1183 = vst [vmem:[#allocation4 + $0x30] sm:$0xff] %v1151
    %1184 = vst [vmem:[#allocation4 + $0x38] sm:$0xff] %v1152
    %1185 = vst [vmem:[#allocation4 + $0x40] sm:$0xff] %v1153
    %1186 = vst [vmem:[#allocation4 + $0x48] sm:$0xff] %v1154
    %1187 = vst [vmem:[#allocation4 + $0x50] sm:$0xff] %v1155
    %1188 = vst [vmem:[#allocation4 + $0x58] sm:$0xff] %v1156
    %1189 = vst [vmem:[#allocation4 + $0x60] sm:$0xff] %v1157
    %1190 = vst [vmem:[#allocation4 + $0x68] sm:$0xff] %v1158
    %1191 = vst [vmem:[#allocation4 + $0x70] sm:$0xff] %v1159
    %1192 = vst [vmem:[#allocation4 + $0x78] sm:$0xff] %v1160
    %1193 = vst [vmem:[#allocation4 + $0x80] sm:$0xff] %v1161
    %1194 = vst [vmem:[#allocation4 + $0x88] sm:$0xff] %v1162
    %1195 = vst [vmem:[#allocation4 + $0x90] sm:$0xff] %v1163
    %1196 = vst [vmem:[#allocation4 + $0x98] sm:$0xff] %v1164
    %1197 = vst [vmem:[#allocation4 + $0xa0] sm:$0xff] %v1165
    %1198 = vst [vmem:[#allocation4 + $0xa8] sm:$0xff] %v1166
    %1199 = vst [vmem:[#allocation4 + $0xb0] sm:$0xff] %v1167
    %1200 = vst [vmem:[#allocation4 + $0xb8] sm:$0xff] %v1168
    %1201 = vst [vmem:[#allocation4 + $0xc0] sm:$0xff] %v1169
    %1202 = vst [vmem:[#allocation4 + $0xc8] sm:$0xff] %v1170
    %1203 = vst [vmem:[#allocation4 + $0xd0] sm:$0xff] %v1171
    %1204 = vst [vmem:[#allocation4 + $0xd8] sm:$0xff] %v1172
    %1205 = vst [vmem:[#allocation4 + $0xe0] sm:$0xff] %v1173
    %1206 = vst [vmem:[#allocation4 + $0xe8] sm:$0xff] %v1174
    %1207 = vst [vmem:[#allocation4 + $0xf0] sm:$0xff] %v1175
    %1208 = vst [vmem:[#allocation4 + $0xf8] sm:$0xff] %v1176
    %1209 = vst [vmem:[#allocation3] sm:$0xff] %v995
    %1210 = vst [vmem:[#allocation3 + $0x8] sm:$0xff] %v996
    %1211 = vst [vmem:[#allocation3 + $0x10] sm:$0xff] %v997
    %1212 = vst [vmem:[#allocation3 + $0x18] sm:$0xff] %v998
    %1213 = vst [vmem:[#allocation3 + $0x20] sm:$0xff] %v999
    %1214 = vst [vmem:[#allocation3 + $0x28] sm:$0xff] %v1000
    %1215 = vst [vmem:[#allocation3 + $0x30] sm:$0xff] %v1001
    %1216 = vst [vmem:[#allocation3 + $0x38] sm:$0xff] %v1002
    %1217 = vst [vmem:[#allocation3 + $0x40] sm:$0xff] %v1003
    %1218 = vst [vmem:[#allocation3 + $0x48] sm:$0xff] %v1004
    %1219 = vst [vmem:[#allocation3 + $0x50] sm:$0xff] %v1005
    %1220 = vst [vmem:[#allocation3 + $0x58] sm:$0xff] %v1006
    %1221 = vst [vmem:[#allocation3 + $0x60] sm:$0xff] %v1007
    %1222 = vst [vmem:[#allocation3 + $0x68] sm:$0xff] %v1008
    %1223 = vst [vmem:[#allocation3 + $0x70] sm:$0xff] %v1009
    %1224 = vst [vmem:[#allocation3 + $0x78] sm:$0xff] %v1010
    %1225 = vst [vmem:[#allocation3 + $0x80] sm:$0xff] %v1011
    %1226 = vst [vmem:[#allocation3 + $0x88] sm:$0xff] %v1012
    %1227 = vst [vmem:[#allocation3 + $0x90] sm:$0xff] %v1013
    %1228 = vst [vmem:[#allocation3 + $0x98] sm:$0xff] %v1014
    %1229 = vst [vmem:[#allocation3 + $0xa0] sm:$0xff] %v1015
    %1230 = vst [vmem:[#allocation3 + $0xa8] sm:$0xff] %v1016
    %1231 = vst [vmem:[#allocation3 + $0xb0] sm:$0xff] %v1017
    %1232 = vst [vmem:[#allocation3 + $0xb8] sm:$0xff] %v1018
    %1233 = vst [vmem:[#allocation3 + $0xc0] sm:$0xff] %v1019
    %1234 = vst [vmem:[#allocation3 + $0xc8] sm:$0xff] %v1020
    %1235 = vst [vmem:[#allocation3 + $0xd0] sm:$0xff] %v1021
    %1236 = vst [vmem:[#allocation3 + $0xd8] sm:$0xff] %v1022
    %1237 = vst [vmem:[#allocation3 + $0xe0] sm:$0xff] %v1023
    %1238 = vst [vmem:[#allocation3 + $0xe8] sm:$0xff] %v1024
    %1239 = vst [vmem:[#allocation3 + $0xf0] sm:$0xff] %v1025
    %1240 = vst [vmem:[#allocation3 + $0xf8] sm:$0xff] %v1026
  $region22: #{binarize_sparse_code_forward.1} parent=0 // loop_footer
    %s477 = sadd.s32 1, %s473
  $region23: #{binarize_sparse_code_forward.1} parent=0 // loop_footer_branch
    %472 = sbr.rel target = $region19
  $region24: #{binarize_sparse_code_forward.1} parent=0 // loop_exit
    _
  %v1241 = vld [vmem:[#allocation3] sm:$0xff]
  %v1242 = vld [vmem:[#allocation3 + $0x8] sm:$0xff]
  %v1243 = vld [vmem:[#allocation3 + $0x10] sm:$0xff]
  %v1244 = vld [vmem:[#allocation3 + $0x18] sm:$0xff]
  %v1245 = vld [vmem:[#allocation3 + $0x20] sm:$0xff]
  %v1246 = vld [vmem:[#allocation3 + $0x28] sm:$0xff]
  %v1247 = vld [vmem:[#allocation3 + $0x30] sm:$0xff]
  %v1248 = vld [vmem:[#allocation3 + $0x38] sm:$0xff]
  %v1249 = vld [vmem:[#allocation3 + $0x40] sm:$0xff]
  %v1250 = vld [vmem:[#allocation3 + $0x48] sm:$0xff]
  %v1251 = vld [vmem:[#allocation3 + $0x50] sm:$0xff]
  %v1252 = vld [vmem:[#allocation3 + $0x58] sm:$0xff]
  %v1253 = vld [vmem:[#allocation3 + $0x60] sm:$0xff]
  %v1254 = vld [vmem:[#allocation3 + $0x68] sm:$0xff]
  %v1255 = vld [vmem:[#allocation3 + $0x70] sm:$0xff]
  %v1256 = vld [vmem:[#allocation3 + $0x78] sm:$0xff]
  %v1257 = vld [vmem:[#allocation3 + $0x80] sm:$0xff]
  %v1258 = vld [vmem:[#allocation3 + $0x88] sm:$0xff]
  %v1259 = vld [vmem:[#allocation3 + $0x90] sm:$0xff]
  %v1260 = vld [vmem:[#allocation3 + $0x98] sm:$0xff]
  %v1261 = vld [vmem:[#allocation3 + $0xa0] sm:$0xff]
  %v1262 = vld [vmem:[#allocation3 + $0xa8] sm:$0xff]
  %v1263 = vld [vmem:[#allocation3 + $0xb0] sm:$0xff]
  %v1264 = vld [vmem:[#allocation3 + $0xb8] sm:$0xff]
  %v1265 = vld [vmem:[#allocation3 + $0xc0] sm:$0xff]
  %v1266 = vld [vmem:[#allocation3 + $0xc8] sm:$0xff]
  %v1267 = vld [vmem:[#allocation3 + $0xd0] sm:$0xff]
  %v1268 = vld [vmem:[#allocation3 + $0xd8] sm:$0xff]
  %v1269 = vld [vmem:[#allocation3 + $0xe0] sm:$0xff]
  %v1270 = vld [vmem:[#allocation3 + $0xe8] sm:$0xff]
  %v1271 = vld [vmem:[#allocation3 + $0xf0] sm:$0xff]
  %v1272 = vld [vmem:[#allocation3 + $0xf8] sm:$0xff]
  %1273 = vst [vmem:[%s4] sm:$0xff] %v1241
  %1274 = vst [vmem:[%s4 + $0x8] sm:$0xff] %v1242
  %1275 = vst [vmem:[%s4 + $0x10] sm:$0xff] %v1243
  %1276 = vst [vmem:[%s4 + $0x18] sm:$0xff] %v1244
  %1277 = vst [vmem:[%s4 + $0x20] sm:$0xff] %v1245
  %1278 = vst [vmem:[%s4 + $0x28] sm:$0xff] %v1246
  %1279 = vst [vmem:[%s4 + $0x30] sm:$0xff] %v1247
  %1280 = vst [vmem:[%s4 + $0x38] sm:$0xff] %v1248
  %1281 = vst [vmem:[%s4 + $0x40] sm:$0xff] %v1249
  %1282 = vst [vmem:[%s4 + $0x48] sm:$0xff] %v1250
  %1283 = vst [vmem:[%s4 + $0x50] sm:$0xff] %v1251
  %1284 = vst [vmem:[%s4 + $0x58] sm:$0xff] %v1252
  %1285 = vst [vmem:[%s4 + $0x60] sm:$0xff] %v1253
  %1286 = vst [vmem:[%s4 + $0x68] sm:$0xff] %v1254
  %1287 = vst [vmem:[%s4 + $0x70] sm:$0xff] %v1255
  %1288 = vst [vmem:[%s4 + $0x78] sm:$0xff] %v1256
  %1289 = vst [vmem:[%s4 + $0x80] sm:$0xff] %v1257
  %1290 = vst [vmem:[%s4 + $0x88] sm:$0xff] %v1258
  %1291 = vst [vmem:[%s4 + $0x90] sm:$0xff] %v1259
  %1292 = vst [vmem:[%s4 + $0x98] sm:$0xff] %v1260
  %1293 = vst [vmem:[%s4 + $0xa0] sm:$0xff] %v1261
  %1294 = vst [vmem:[%s4 + $0xa8] sm:$0xff] %v1262
  %1295 = vst [vmem:[%s4 + $0xb0] sm:$0xff] %v1263
  %1296 = vst [vmem:[%s4 + $0xb8] sm:$0xff] %v1264
  %1297 = vst [vmem:[%s4 + $0xc0] sm:$0xff] %v1265
  %1298 = vst [vmem:[%s4 + $0xc8] sm:$0xff] %v1266
  %1299 = vst [vmem:[%s4 + $0xd0] sm:$0xff] %v1267
  %1300 = vst [vmem:[%s4 + $0xd8] sm:$0xff] %v1268
  %1301 = vst [vmem:[%s4 + $0xe0] sm:$0xff] %v1269
  %1302 = vst [vmem:[%s4 + $0xe8] sm:$0xff] %v1270
  %1303 = vst [vmem:[%s4 + $0xf0] sm:$0xff] %v1271
  %1304 = vst [vmem:[%s4 + $0xf8] sm:$0xff] %v1272
  %vm1305 = vcmp.gt.f32.partialorder %v1241, 0.0
  %vm1306 = vcmp.gt.f32.partialorder %v1242, 0.0
  %vm1307 = vcmp.gt.f32.partialorder %v1243, 0.0
  %vm1308 = vcmp.gt.f32.partialorder %v1244, 0.0
  %vm1309 = vcmp.gt.f32.partialorder %v1245, 0.0
  %vm1310 = vcmp.gt.f32.partialorder %v1246, 0.0
  %vm1311 = vcmp.gt.f32.partialorder %v1247, 0.0
  %vm1312 = vcmp.gt.f32.partialorder %v1248, 0.0
  %vm1313 = vcmp.gt.f32.partialorder %v1249, 0.0
  %vm1314 = vcmp.gt.f32.partialorder %v1250, 0.0
  %vm1315 = vcmp.gt.f32.partialorder %v1251, 0.0
  %vm1316 = vcmp.gt.f32.partialorder %v1252, 0.0
  %vm1317 = vcmp.gt.f32.partialorder %v1253, 0.0
  %vm1318 = vcmp.gt.f32.partialorder %v1254, 0.0
  %vm1319 = vcmp.gt.f32.partialorder %v1255, 0.0
  %vm1320 = vcmp.gt.f32.partialorder %v1256, 0.0
  %vm1321 = vcmp.gt.f32.partialorder %v1257, 0.0
  %vm1322 = vcmp.gt.f32.partialorder %v1258, 0.0
  %vm1323 = vcmp.gt.f32.partialorder %v1259, 0.0
  %vm1324 = vcmp.gt.f32.partialorder %v1260, 0.0
  %vm1325 = vcmp.gt.f32.partialorder %v1261, 0.0
  %vm1326 = vcmp.gt.f32.partialorder %v1262, 0.0
  %vm1327 = vcmp.gt.f32.partialorder %v1263, 0.0
  %vm1328 = vcmp.gt.f32.partialorder %v1264, 0.0
  %vm1329 = vcmp.gt.f32.partialorder %v1265, 0.0
  %vm1330 = vcmp.gt.f32.partialorder %v1266, 0.0
  %vm1331 = vcmp.gt.f32.partialorder %v1267, 0.0
  %vm1332 = vcmp.gt.f32.partialorder %v1268, 0.0
  %vm1333 = vcmp.gt.f32.partialorder %v1269, 0.0
  %vm1334 = vcmp.gt.f32.partialorder %v1270, 0.0
  %vm1335 = vcmp.gt.f32.partialorder %v1271, 0.0
  %vm1336 = vcmp.gt.f32.partialorder %v1272, 0.0
  %v1337 = vsel %vm1305, 1, 0
  %v1338 = vsel %vm1306, 1, 0
  %v1339 = vsel %vm1307, 1, 0
  %v1340 = vsel %vm1308, 1, 0
  %v1341 = vsel %vm1309, 1, 0
  %v1342 = vsel %vm1310, 1, 0
  %v1343 = vsel %vm1311, 1, 0
  %v1344 = vsel %vm1312, 1, 0
  %v1345 = vsel %vm1313, 1, 0
  %v1346 = vsel %vm1314, 1, 0
  %v1347 = vsel %vm1315, 1, 0
  %v1348 = vsel %vm1316, 1, 0
  %v1349 = vsel %vm1317, 1, 0
  %v1350 = vsel %vm1318, 1, 0
  %v1351 = vsel %vm1319, 1, 0
  %v1352 = vsel %vm1320, 1, 0
  %v1353 = vsel %vm1321, 1, 0
  %v1354 = vsel %vm1322, 1, 0
  %v1355 = vsel %vm1323, 1, 0
  %v1356 = vsel %vm1324, 1, 0
  %v1357 = vsel %vm1325, 1, 0
  %v1358 = vsel %vm1326, 1, 0
  %v1359 = vsel %vm1327, 1, 0
  %v1360 = vsel %vm1328, 1, 0
  %v1361 = vsel %vm1329, 1, 0
  %v1362 = vsel %vm1330, 1, 0
  %v1363 = vsel %vm1331, 1, 0
  %v1364 = vsel %vm1332, 1, 0
  %v1365 = vsel %vm1333, 1, 0
  %v1366 = vsel %vm1334, 1, 0
  %v1367 = vsel %vm1335, 1, 0
  %v1368 = vsel %vm1336, 1, 0
  %v1369 = vcvt.s32.f32 %v1337
  %v1370 = vcvt.s32.f32 %v1338
  %v1371 = vcvt.s32.f32 %v1339
  %v1372 = vcvt.s32.f32 %v1340
  %v1373 = vcvt.s32.f32 %v1341
  %v1374 = vcvt.s32.f32 %v1342
  %v1375 = vcvt.s32.f32 %v1343
  %v1376 = vcvt.s32.f32 %v1344
  %v1377 = vcvt.s32.f32 %v1345
  %v1378 = vcvt.s32.f32 %v1346
  %v1379 = vcvt.s32.f32 %v1347
  %v1380 = vcvt.s32.f32 %v1348
  %v1381 = vcvt.s32.f32 %v1349
  %v1382 = vcvt.s32.f32 %v1350
  %v1383 = vcvt.s32.f32 %v1351
  %v1384 = vcvt.s32.f32 %v1352
  %v1385 = vcvt.s32.f32 %v1353
  %v1386 = vcvt.s32.f32 %v1354
  %v1387 = vcvt.s32.f32 %v1355
  %v1388 = vcvt.s32.f32 %v1356
  %v1389 = vcvt.s32.f32 %v1357
  %v1390 = vcvt.s32.f32 %v1358
  %v1391 = vcvt.s32.f32 %v1359
  %v1392 = vcvt.s32.f32 %v1360
  %v1393 = vcvt.s32.f32 %v1361
  %v1394 = vcvt.s32.f32 %v1362
  %v1395 = vcvt.s32.f32 %v1363
  %v1396 = vcvt.s32.f32 %v1364
  %v1397 = vcvt.s32.f32 %v1365
  %v1398 = vcvt.s32.f32 %v1366
  %v1399 = vcvt.s32.f32 %v1367
  %v1400 = vcvt.s32.f32 %v1368
  %1401 = vst [vmem:[%s5] sm:$0xff] %v1369
  %1402 = vst [vmem:[%s5 + $0x8] sm:$0xff] %v1370
  %1403 = vst [vmem:[%s5 + $0x10] sm:$0xff] %v1371
  %1404 = vst [vmem:[%s5 + $0x18] sm:$0xff] %v1372
  %1405 = vst [vmem:[%s5 + $0x20] sm:$0xff] %v1373
  %1406 = vst [vmem:[%s5 + $0x28] sm:$0xff] %v1374
  %1407 = vst [vmem:[%s5 + $0x30] sm:$0xff] %v1375
  %1408 = vst [vmem:[%s5 + $0x38] sm:$0xff] %v1376
  %1409 = vst [vmem:[%s5 + $0x40] sm:$0xff] %v1377
  %1410 = vst [vmem:[%s5 + $0x48] sm:$0xff] %v1378
  %1411 = vst [vmem:[%s5 + $0x50] sm:$0xff] %v1379
  %1412 = vst [vmem:[%s5 + $0x58] sm:$0xff] %v1380
  %1413 = vst [vmem:[%s5 + $0x60] sm:$0xff] %v1381
  %1414 = vst [vmem:[%s5 + $0x68] sm:$0xff] %v1382
  %1415 = vst [vmem:[%s5 + $0x70] sm:$0xff] %v1383
  %1416 = vst [vmem:[%s5 + $0x78] sm:$0xff] %v1384
  %1417 = vst [vmem:[%s5 + $0x80] sm:$0xff] %v1385
  %1418 = vst [vmem:[%s5 + $0x88] sm:$0xff] %v1386
  %1419 = vst [vmem:[%s5 + $0x90] sm:$0xff] %v1387
  %1420 = vst [vmem:[%s5 + $0x98] sm:$0xff] %v1388
  %1421 = vst [vmem:[%s5 + $0xa0] sm:$0xff] %v1389
  %1422 = vst [vmem:[%s5 + $0xa8] sm:$0xff] %v1390
  %1423 = vst [vmem:[%s5 + $0xb0] sm:$0xff] %v1391
  %1424 = vst [vmem:[%s5 + $0xb8] sm:$0xff] %v1392
  %1425 = vst [vmem:[%s5 + $0xc0] sm:$0xff] %v1393
  %1426 = vst [vmem:[%s5 + $0xc8] sm:$0xff] %v1394
  %1427 = vst [vmem:[%s5 + $0xd0] sm:$0xff] %v1395
  %1428 = vst [vmem:[%s5 + $0xd8] sm:$0xff] %v1396
  %1429 = vst [vmem:[%s5 + $0xe0] sm:$0xff] %v1397
  %1430 = vst [vmem:[%s5 + $0xe8] sm:$0xff] %v1398
  %1431 = vst [vmem:[%s5 + $0xf0] sm:$0xff] %v1399
  %1432 = vst [vmem:[%s5 + $0xf8] sm:$0xff] %v1400
  // Predicated region
  $region25: #{binarize_sparse_code_forward.1} parent=0 // pred_check
    _
  $region26: #{binarize_sparse_code_forward.1} parent=0 // pred_check_branch
    %1434 = sbr.rel (0) target = $region28
  $region27: #{binarize_sparse_code_forward.1} parent=0 // pred_region
    _
  $region28: #{binarize_sparse_code_forward.1} parent=0 // pred_fallthru
    _
  // Predicated region
  $region29: #{binarize_sparse_code_forward.1} parent=0 // pred_check
    _
  $region30: #{binarize_sparse_code_forward.1} parent=0 // pred_check_branch
    %1436 = sbr.rel (0) target = $region32
  $region31: #{binarize_sparse_code_forward.1} parent=0 // pred_region
    _
  $region32: #{binarize_sparse_code_forward.1} parent=0 // pred_fallthru
    _
  // Predicated region
  $region33: #{binarize_sparse_code_forward.1} parent=0 // pred_check
    _
  $region34: #{binarize_sparse_code_forward.1} parent=0 // pred_check_branch
    %1438 = sbr.rel (0) target = $region36
  $region35: #{binarize_sparse_code_forward.1} parent=0 // pred_region
    _
  $region36: #{binarize_sparse_code_forward.1} parent=0 // pred_fallthru
    _
  // Predicated region
  $region37: #{binarize_sparse_code_forward.1} parent=0 // pred_check
    _
  $region38: #{binarize_sparse_code_forward.1} parent=0 // pred_check_branch
    %1440 = sbr.rel (0) target = $region40
  $region39: #{binarize_sparse_code_forward.1} parent=0 // pred_region
    _
  $region40: #{binarize_sparse_code_forward.1} parent=0 // pred_fallthru
    _

</llo_original>
